<compile_context>
chip_gen: v7x
topology: tpu7x:2x2x1
jax: 0.10.0
libtpu: 0.0.40
codegen_flags: <defaults>
</compile_context>

<pallas_src>
import functools

import jax
import jax.numpy as jnp
from jax import lax
from jax.experimental import pallas as pl
from jax.experimental.pallas import tpu as pltpu


def _round_up(v, m):
    return -(-v // m) * m


def _vmem_limit_bytes():
    # ~70% of physical VMEM, leaving headroom for compiler-managed temporaries.
    # v5e/v6e: 128 MiB physical, v7x: 64 MiB per TensorCore.
    phys = 64 * 1024 * 1024
    try:
        info = pltpu.get_tpu_info()
        phys = getattr(info, "vmem_capacity_bytes", phys) or phys
    except Exception:
        pass
    return int(min(max(phys * 0.7, 32 * 1024 * 1024), 96 * 1024 * 1024))


# ----------------------------------------------------------------------------
# Fused kernel (one frame per program):
#   temporal shift -> im2col-along-C (3*C) halo scratch -> 3 matmuls (K = 3*C).
# ----------------------------------------------------------------------------
def _tsm_conv3x3_kernel(cur_ref, prv_ref, nxt_ref, w_ref, b_ref, o_ref,
                        pad3_ref, acc_ref, *, fold):
    H, W, C = cur_ref.shape
    Cout = o_ref.shape[-1]
    Wp = pad3_ref.shape[1]          # padded width (>= W + 1, multiple of 8)
    bf = pad3_ref.dtype
    t = pl.program_id(1)
    nt = pl.num_programs(1)

    # --- zero only the halo rows and the OOB columns the valid outputs read ---
    pad3_ref[0:1, :, :] = jnp.zeros((1, Wp, 3 * C), bf)            # top halo row
    pad3_ref[H + 1:H + 2, :, :] = jnp.zeros((1, Wp, 3 * C), bf)    # bottom halo row
    pad3_ref[1:H + 1, 0:1, 0:C] = jnp.zeros((H, 1, C), bf)         # left OOB (kw=0 tap)
    pad3_ref[1:H + 1, W - 1:W, 2 * C:3 * C] = jnp.zeros((H, 1, C), bf)  # right OOB (kw=2)

    # --- temporal shift (TSM), assembled once into the centre-tap (kw=1) block ---
    pad3_ref[1:H + 1, 0:W, C:2 * C] = cur_ref[...]
    if fold > 0:
        @pl.when(t < nt - 1)
        def _():            # channels [0, fold): from frame t+1
            pad3_ref[1:H + 1, 0:W, C:C + fold] = nxt_ref[:, :, 0:fold]

        @pl.when(t == nt - 1)
        def _():            # zero at the last frame
            pad3_ref[1:H + 1, 0:W, C:C + fold] = jnp.zeros((H, W, fold), bf)

        @pl.when(t > 0)
        def _():            # channels [fold, 2*fold): from frame t-1
            pad3_ref[1:H + 1, 0:W, C + fold:C + 2 * fold] = prv_ref[:, :, fold:2 * fold]

        @pl.when(t == 0)
        def _():            # zero at the first frame
            pad3_ref[1:H + 1, 0:W, C + fold:C + 2 * fold] = jnp.zeros((H, W, fold), bf)

    # --- replicate the shifted frame into the kw=0 / kw=2 tap blocks (im2col-along-C) ---
    shifted = pad3_ref[1:H + 1, 0:W, C:2 * C]                 # (H, W, C) shifted frame
    pad3_ref[1:H + 1, 1:W + 1, 0:C] = shifted                 # kw=0 tap: img col w-1
    if W > 1:
        pad3_ref[1:H + 1, 0:W - 1, 2 * C:3 * C] = shifted[:, 1:W, :]   # kw=2 tap: img col w+1

    # --- 3x3 SAME conv: 3 MXU matmuls with K = 3*C, bias folded into the acc init ---
    acc_ref[...] = jnp.broadcast_to(b_ref[...].astype(jnp.float32), acc_ref.shape)
    for kh in range(3):
        lhs = pad3_ref[kh:kh + H, :, :].reshape(H * Wp, 3 * C)   # major-dim slice, free reshape
        acc_ref[...] += jnp.dot(lhs, w_ref[kh], preferred_element_type=jnp.float32)

    o_ref[...] = acc_ref[...].reshape(H, Wp, Cout)[:, 0:W, :].astype(o_ref.dtype)


def temporal_shift_conv(x, w, b, *, fold, out_dtype=jnp.float32):
    """x: (N, T, H, W, C) bf16; w: (3, 3*C, Cout) bf16; b: (1, Cout) f32."""
    N, T, H, W, C = x.shape
    Cout = w.shape[-1]
    Wp = max(8, _round_up(W + 1, 8))   # >= W+1 zero-padded columns, sublane aligned

    kernel = functools.partial(_tsm_conv3x3_kernel, fold=fold)
    return pl.pallas_call(
        kernel,
        out_shape=jax.ShapeDtypeStruct((N, T, H, W, Cout), out_dtype),
        grid=(N, T),
        in_specs=[
            # current frame
            pl.BlockSpec((None, None, H, W, C), lambda n, t: (n, t, 0, 0, 0)),
            # previous frame (clamped at t=0; contents unused there)
            pl.BlockSpec((None, None, H, W, C),
                         lambda n, t: (n, jnp.maximum(t - 1, 0), 0, 0, 0)),
            # next frame (clamped at t=T-1; contents unused there)
            pl.BlockSpec((None, None, H, W, C),
                         lambda n, t: (n, jnp.minimum(t + 1, T - 1), 0, 0, 0)),
            pl.BlockSpec((3, 3 * C, Cout), lambda n, t: (0, 0, 0)),
            pl.BlockSpec((1, Cout), lambda n, t: (0, 0)),
        ],
        out_specs=pl.BlockSpec((None, None, H, W, Cout), lambda n, t: (n, t, 0, 0, 0)),
        scratch_shapes=[
            pltpu.VMEM((H + 2, Wp, 3 * C), jnp.bfloat16),   # im2col-along-C halo scratch
            pltpu.VMEM((H * Wp, Cout), jnp.float32),        # f32 accumulator
        ],
        compiler_params=pltpu.CompilerParams(
            # all (n, t) steps are independent (no cross-step scratch state)
            dimension_semantics=("parallel", "parallel"),
            vmem_limit_bytes=_vmem_limit_bytes(),
        ),
    )(x, x, x, w, b)


# ----------------------------------------------------------------------------
# TemporalShift module equivalent (shift_block -> net), net = Conv2d(3x3, pad=1).
# ----------------------------------------------------------------------------
class TemporalShiftPallas:
    def __init__(self, in_channels, out_channels, n_segment=4, n_div=8, key=None):
        self.n_segment = n_segment
        self.n_div = n_div
        self.in_channels = in_channels
        self.out_channels = out_channels
        key = jax.random.PRNGKey(0) if key is None else key
        k1, k2 = jax.random.split(key)
        fan_in = in_channels * 3 * 3
        bound = float(1.0 / (fan_in ** 0.5))   # PyTorch Conv2d default init range
        self.w = jax.random.uniform(
            k1, (3, 3, in_channels, out_channels), jnp.float32, -bound, bound
        )
        self.b = jax.random.uniform(
            k2, (1, out_channels), jnp.float32, -bound, bound
        )

    def __call__(self, x_nchw):
        NT, C, H, W = x_nchw.shape
        N = NT // self.n_segment
        T = self.n_segment
        Cout = self.out_channels
        fold = C // self.n_div      # remainder channels stay unshifted, as in TSM

        # Lane-dense channel padding (multiples of 128) so output stores are unmasked
        # and the MXU K/N dims are dense even for tiny channel counts.
        LANE = 128
        Cp = _round_up(C, LANE)
        Cop = _round_up(Cout, LANE)

        x = jnp.transpose(x_nchw, (0, 2, 3, 1)).astype(jnp.bfloat16)   # NCHW -> NHWC, bf16
        x = x.reshape(N, T, H, W, C)
        if Cp != C:
            x = jnp.pad(x, ((0, 0),) * 4 + ((0, Cp - C),))

        w = self.w.astype(jnp.bfloat16)
        if Cp != C or Cop != Cout:
            w = jnp.pad(w, ((0, 0), (0, 0), (0, Cp - C), (0, Cop - Cout)))
        w = w.reshape(3, 3 * Cp, Cop)       # rows ordered (kw, c) to match im2col blocks

        b = self.b
        if Cop != Cout:
            b = jnp.pad(b, ((0, 0), (0, Cop - Cout)))

        y = temporal_shift_conv(x, w, b, fold=fold, out_dtype=x_nchw.dtype)
        y = y[..., :Cout].reshape(NT, H, W, Cout)
        return jnp.transpose(y, (0, 3, 1, 2))              # back to NCHW


# ----------------------------------------------------------------------------
# Pure-JAX f32 reference for correctness checking.
# ----------------------------------------------------------------------------
def _reference(x_nchw, w_hwio, b, n_segment, n_div):
    NT, C, H, W = x_nchw.shape
    N = NT // n_segment
    fold = C // n_div
    x = x_nchw.reshape(N, n_segment, C, H, W)
    out = jnp.zeros_like(x)
    out = out.at[:, :-1, :fold].set(x[:, 1:, :fold])
    out = out.at[:, 1:, fold:2 * fold].set(x[:, :-1, fold:2 * fold])
    out = out.at[:, :, 2 * fold:].set(x[:, :, 2 * fold:])
    xs = out.reshape(NT, C, H, W)
    xs_nhwc = jnp.transpose(xs, (0, 2, 3, 1))
    y = lax.conv_general_dilated(
        xs_nhwc, w_hwio, window_strides=(1, 1), padding="SAME",
        dimension_numbers=("NHWC", "HWIO", "NHWC"),
    ) + b.reshape(1, 1, 1, -1)
    return jnp.transpose(y, (0, 3, 1, 2))


if __name__ == "__main__":
    n_segment, n_div = 4, 8
    N, C, H, W = 2, 16, 8, 8
    Cout = 16
    NT = N * n_segment

    key = jax.random.PRNGKey(0)
    kx, kp = jax.random.split(key)
    x = jax.random.normal(kx, (NT, C, H, W), dtype=jnp.float32)  # PyTorch NCHW

    mod = TemporalShiftPallas(C, Cout, n_segment=n_segment, n_div=n_div, key=kp)
    out = jax.block_until_ready(mod(x))

    ref = jax.block_until_ready(_reference(x, mod.w, mod.b, n_segment, n_div))
    assert out.shape == (NT, Cout, H, W), out.shape
    # Tolerance loosened vs the f32 reference because matmul operands are bf16
    # (f32 accumulation); shift/indexing bugs would show up as O(1) errors.
    assert jnp.allclose(out, ref, atol=5e-2, rtol=5e-2), float(
        jnp.max(jnp.abs(out - ref))
    )
    print("KERNEL_OK")
</pallas_src>

<mosaic_0001>
module attributes {stable_mosaic.version = 11 : i64} {
  func.func @_tsm_conv3x3_kernel(%arg0: i32, %arg1: i32, %arg2: memref<1x1x8x8x128xbf16, #tpu.memory_space<vmem>>, %arg3: memref<1x1x8x8x128xbf16, #tpu.memory_space<vmem>>, %arg4: memref<1x1x8x8x128xbf16, #tpu.memory_space<vmem>>, %arg5: memref<3x384x128xbf16, #tpu.memory_space<vmem>>, %arg6: memref<1x128xf32, #tpu.memory_space<vmem>>, %arg7: memref<1x1x8x8x128xf32, #tpu.memory_space<vmem>>, %arg8: memref<10x16x384xbf16, #tpu.memory_space<vmem>>, %arg9: memref<128x128xf32, #tpu.memory_space<vmem>>) attributes {dimension_semantics = [#tpu.dimension_semantics<parallel>, #tpu.dimension_semantics<parallel>], iteration_bounds = array<i64: 2, 4>, scalar_prefetch = 0 : i64, scratch_operands = 2 : i64, tpu.core_type = #tpu.core_type<tc>, window_params = [{transform_indices = @transform_0, window_bounds = array<i64: 1, 1, 8, 8, 128>}, {transform_indices = @transform_1, window_bounds = array<i64: 1, 1, 8, 8, 128>}, {transform_indices = @transform_2, window_bounds = array<i64: 1, 1, 8, 8, 128>}, {pipeline_mode = #tpu.pipeline_mode<synchronous>, transform_indices = @transform_3, window_bounds = array<i64: 3, 384, 128>}, {pipeline_mode = #tpu.pipeline_mode<synchronous>, transform_indices = @transform_4, window_bounds = array<i64: 1, 128>}, {transform_indices = @transform_5, window_bounds = array<i64: 1, 1, 8, 8, 128>}]} {
    %cst = arith.constant 0.000000e+00 : bf16
    %0 = vector.broadcast %cst : bf16 to vector<1x16x384xbf16>
    %c0 = arith.constant 0 : index
    %c0_0 = arith.constant 0 : index
    %c0_1 = arith.constant 0 : index
    %1 = vector.load %arg8[%c0, %c0_0, %c0_1] : memref<10x16x384xbf16, #tpu.memory_space<vmem>>, vector<1x16x384xbf16>
    tpu.vector_store %arg8[%c0, %c0_0, %c0_1], %0 {strides = array<i32>} : memref<10x16x384xbf16, #tpu.memory_space<vmem>>, vector<1x16x384xbf16>,
    %cst_2 = arith.constant 0.000000e+00 : bf16
    %2 = vector.broadcast %cst_2 : bf16 to vector<1x16x384xbf16>
    %c9 = arith.constant 9 : index
    %c0_3 = arith.constant 0 : index
    %c0_4 = arith.constant 0 : index
    %3 = vector.load %arg8[%c9, %c0_3, %c0_4] : memref<10x16x384xbf16, #tpu.memory_space<vmem>>, vector<1x16x384xbf16>
    tpu.vector_store %arg8[%c9, %c0_3, %c0_4], %2 {strides = array<i32>} : memref<10x16x384xbf16, #tpu.memory_space<vmem>>, vector<1x16x384xbf16>,
    %cst_5 = arith.constant 0.000000e+00 : bf16
    %4 = vector.broadcast %cst_5 : bf16 to vector<8x1x128xbf16>
    %c1 = arith.constant 1 : index
    %c0_6 = arith.constant 0 : index
    %c0_7 = arith.constant 0 : index
    %5 = vector.load %arg8[%c1, %c0_6, %c0_7] : memref<10x16x384xbf16, #tpu.memory_space<vmem>>, vector<8x1x128xbf16>
    tpu.vector_store %arg8[%c1, %c0_6, %c0_7], %4 {strides = array<i32>} : memref<10x16x384xbf16, #tpu.memory_space<vmem>>, vector<8x1x128xbf16>,
    %cst_8 = arith.constant 0.000000e+00 : bf16
    %6 = vector.broadcast %cst_8 : bf16 to vector<8x1x128xbf16>
    %c1_9 = arith.constant 1 : index
    %c7 = arith.constant 7 : index
    %c256 = arith.constant 256 : index
    %7 = vector.load %arg8[%c1_9, %c7, %c256] : memref<10x16x384xbf16, #tpu.memory_space<vmem>>, vector<8x1x128xbf16>
    tpu.vector_store %arg8[%c1_9, %c7, %c256], %6 {strides = array<i32>} : memref<10x16x384xbf16, #tpu.memory_space<vmem>>, vector<8x1x128xbf16>,
    %c0_10 = arith.constant 0 : index
    %c0_11 = arith.constant 0 : index
    %c0_12 = arith.constant 0 : index
    %c0_13 = arith.constant 0 : index
    %c0_14 = arith.constant 0 : index
    %8 = vector.load %arg2[%c0_10, %c0_11, %c0_12, %c0_13, %c0_14] : memref<1x1x8x8x128xbf16, #tpu.memory_space<vmem>>, vector<1x1x8x8x128xbf16>
    %9 = vector.shape_cast %8 : vector<1x1x8x8x128xbf16> to vector<8x8x128xbf16>
    %c1_15 = arith.constant 1 : index
    %c0_16 = arith.constant 0 : index
    %c128 = arith.constant 128 : index
    %10 = vector.load %arg8[%c1_15, %c0_16, %c128] : memref<10x16x384xbf16, #tpu.memory_space<vmem>>, vector<8x8x128xbf16>
    tpu.vector_store %arg8[%c1_15, %c0_16, %c128], %9 {strides = array<i32>} : memref<10x16x384xbf16, #tpu.memory_space<vmem>>, vector<8x8x128xbf16>,
    %c3_i32 = arith.constant 3 : i32
    %11 = arith.cmpi slt, %arg1, %c3_i32 : i32
    %12 = arith.extui %11 : i1 to i32
    %c0_i32 = arith.constant 0 : i32
    %13 = arith.cmpi ne, %12, %c0_i32 : i32
    scf.if %13 {
      %c0_75 = arith.constant 0 : index
      %c0_76 = arith.constant 0 : index
      %c0_77 = arith.constant 0 : index
      %c0_78 = arith.constant 0 : index
      %c0_79 = arith.constant 0 : index
      %61 = vector.load %arg4[%c0_75, %c0_76, %c0_77, %c0_78, %c0_79] : memref<1x1x8x8x128xbf16, #tpu.memory_space<vmem>>, vector<1x1x8x8x2xbf16>
      %62 = vector.shape_cast %61 : vector<1x1x8x8x2xbf16> to vector<8x8x2xbf16>
      %c1_80 = arith.constant 1 : index
      %c0_81 = arith.constant 0 : index
      %c128_82 = arith.constant 128 : index
      %63 = vector.load %arg8[%c1_80, %c0_81, %c128_82] : memref<10x16x384xbf16, #tpu.memory_space<vmem>>, vector<8x8x2xbf16>
      tpu.vector_store %arg8[%c1_80, %c0_81, %c128_82], %62 {strides = array<i32>} : memref<10x16x384xbf16, #tpu.memory_space<vmem>>, vector<8x8x2xbf16>,
    } else {
    }
    %c3_i32_17 = arith.constant 3 : i32
    %14 = arith.cmpi eq, %arg1, %c3_i32_17 : i32
    %15 = arith.extui %14 : i1 to i32
    %c0_i32_18 = arith.constant 0 : i32
    %16 = arith.cmpi ne, %15, %c0_i32_18 : i32
    scf.if %16 {
      %cst_75 = arith.constant 0.000000e+00 : bf16
      %61 = vector.broadcast %cst_75 : bf16 to vector<8x8x2xbf16>
      %c1_76 = arith.constant 1 : index
      %c0_77 = arith.constant 0 : index
      %c128_78 = arith.constant 128 : index
      %62 = vector.load %arg8[%c1_76, %c0_77, %c128_78] : memref<10x16x384xbf16, #tpu.memory_space<vmem>>, vector<8x8x2xbf16>
      tpu.vector_store %arg8[%c1_76, %c0_77, %c128_78], %61 {strides = array<i32>} : memref<10x16x384xbf16, #tpu.memory_space<vmem>>, vector<8x8x2xbf16>,
    } else {
    }
    %c0_i32_19 = arith.constant 0 : i32
    %17 = arith.cmpi sgt, %arg1, %c0_i32_19 : i32
    %18 = arith.extui %17 : i1 to i32
    %c0_i32_20 = arith.constant 0 : i32
    %19 = arith.cmpi ne, %18, %c0_i32_20 : i32
    scf.if %19 {
      %c0_75 = arith.constant 0 : index
      %c0_76 = arith.constant 0 : index
      %c0_77 = arith.constant 0 : index
      %c0_78 = arith.constant 0 : index
      %c2_79 = arith.constant 2 : index
      %61 = vector.load %arg3[%c0_75, %c0_76, %c0_77, %c0_78, %c2_79] : memref<1x1x8x8x128xbf16, #tpu.memory_space<vmem>>, vector<1x1x8x8x2xbf16>
      %62 = vector.shape_cast %61 : vector<1x1x8x8x2xbf16> to vector<8x8x2xbf16>
      %c1_80 = arith.constant 1 : index
      %c0_81 = arith.constant 0 : index
      %c130 = arith.constant 130 : index
      %63 = vector.load %arg8[%c1_80, %c0_81, %c130] : memref<10x16x384xbf16, #tpu.memory_space<vmem>>, vector<8x8x2xbf16>
      tpu.vector_store %arg8[%c1_80, %c0_81, %c130], %62 {strides = array<i32>} : memref<10x16x384xbf16, #tpu.memory_space<vmem>>, vector<8x8x2xbf16>,
    } else {
    }
    %c0_i32_21 = arith.constant 0 : i32
    %20 = arith.cmpi eq, %arg1, %c0_i32_21 : i32
    %21 = arith.extui %20 : i1 to i32
    %c0_i32_22 = arith.constant 0 : i32
    %22 = arith.cmpi ne, %21, %c0_i32_22 : i32
    scf.if %22 {
      %cst_75 = arith.constant 0.000000e+00 : bf16
      %61 = vector.broadcast %cst_75 : bf16 to vector<8x8x2xbf16>
      %c1_76 = arith.constant 1 : index
      %c0_77 = arith.constant 0 : index
      %c130 = arith.constant 130 : index
      %62 = vector.load %arg8[%c1_76, %c0_77, %c130] : memref<10x16x384xbf16, #tpu.memory_space<vmem>>, vector<8x8x2xbf16>
      tpu.vector_store %arg8[%c1_76, %c0_77, %c130], %61 {strides = array<i32>} : memref<10x16x384xbf16, #tpu.memory_space<vmem>>, vector<8x8x2xbf16>,
    } else {
    }
    %c1_23 = arith.constant 1 : index
    %c0_24 = arith.constant 0 : index
    %c128_25 = arith.constant 128 : index
    %23 = vector.load %arg8[%c1_23, %c0_24, %c128_25] : memref<10x16x384xbf16, #tpu.memory_space<vmem>>, vector<8x8x128xbf16>
    %c1_26 = arith.constant 1 : index
    %c1_27 = arith.constant 1 : index
    %c0_28 = arith.constant 0 : index
    %24 = vector.load %arg8[%c1_26, %c1_27, %c0_28] : memref<10x16x384xbf16, #tpu.memory_space<vmem>>, vector<8x8x128xbf16>
    tpu.vector_store %arg8[%c1_26, %c1_27, %c0_28], %23 {strides = array<i32>} : memref<10x16x384xbf16, #tpu.memory_space<vmem>>, vector<8x8x128xbf16>,
    %25 = vector.extract_strided_slice %23 {offsets = [0, 1, 0], sizes = [8, 7, 128], strides = [1, 1, 1]} : vector<8x8x128xbf16> to vector<8x7x128xbf16>
    %c1_29 = arith.constant 1 : index
    %c0_30 = arith.constant 0 : index
    %c256_31 = arith.constant 256 : index
    %26 = vector.load %arg8[%c1_29, %c0_30, %c256_31] : memref<10x16x384xbf16, #tpu.memory_space<vmem>>, vector<8x7x128xbf16>
    tpu.vector_store %arg8[%c1_29, %c0_30, %c256_31], %25 {strides = array<i32>} : memref<10x16x384xbf16, #tpu.memory_space<vmem>>, vector<8x7x128xbf16>,
    %c0_32 = arith.constant 0 : index
    %c0_33 = arith.constant 0 : index
    %27 = vector.load %arg6[%c0_32, %c0_33] : memref<1x128xf32, #tpu.memory_space<vmem>>, vector<1x128xf32>
    %28 = vector.shape_cast %27 : vector<1x128xf32> to vector<1x128xf32>
    %29 = vector.broadcast %28 : vector<1x128xf32> to vector<128x128xf32>
    %c0_34 = arith.constant 0 : index
    %c0_35 = arith.constant 0 : index
    %30 = vector.load %arg9[%c0_34, %c0_35] : memref<128x128xf32, #tpu.memory_space<vmem>>, vector<128x128xf32>
    tpu.vector_store %arg9[%c0_34, %c0_35], %29 {strides = array<i32>} : memref<128x128xf32, #tpu.memory_space<vmem>>, vector<128x128xf32>,
    %c0_36 = arith.constant 0 : index
    %c0_37 = arith.constant 0 : index
    %c0_38 = arith.constant 0 : index
    %31 = vector.load %arg8[%c0_36, %c0_37, %c0_38] : memref<10x16x384xbf16, #tpu.memory_space<vmem>>, vector<8x16x384xbf16>
    %32 = vector.shape_cast %31 : vector<8x16x384xbf16> to vector<128x384xbf16>
    %c0_39 = arith.constant 0 : index
    %c0_40 = arith.constant 0 : index
    %33 = vector.load %arg9[%c0_39, %c0_40] : memref<128x128xf32, #tpu.memory_space<vmem>>, vector<128x128xf32>
    %c0_41 = arith.constant 0 : index
    %c0_42 = arith.constant 0 : index
    %c0_43 = arith.constant 0 : index
    %34 = vector.load %arg5[%c0_41, %c0_42, %c0_43] : memref<3x384x128xbf16, #tpu.memory_space<vmem>>, vector<1x384x128xbf16>
    %35 = vector.shape_cast %34 : vector<1x384x128xbf16> to vector<384x128xbf16>
    %cst_44 = arith.constant dense<0.000000e+00> : vector<128x128xf32>
    %36 = tpu.matmul %32, %35, %cst_44 {dimension_numbers = #tpu.dot_dimension_numbers<[1], [0], [0], [1], [0, 0, 1, 1], [], []>} : vector<128x384xbf16>, vector<384x128xbf16>, vector<128x128xf32> -> vector<128x128xf32>
    %37 = arith.addf %33, %36 : vector<128x128xf32>
    %c0_45 = arith.constant 0 : index
    %c0_46 = arith.constant 0 : index
    %38 = vector.load %arg9[%c0_45, %c0_46] : memref<128x128xf32, #tpu.memory_space<vmem>>, vector<128x128xf32>
    tpu.vector_store %arg9[%c0_45, %c0_46], %37 {strides = array<i32>} : memref<128x128xf32, #tpu.memory_space<vmem>>, vector<128x128xf32>,
    %c1_47 = arith.constant 1 : index
    %c0_48 = arith.constant 0 : index
    %c0_49 = arith.constant 0 : index
    %39 = vector.load %arg8[%c1_47, %c0_48, %c0_49] : memref<10x16x384xbf16, #tpu.memory_space<vmem>>, vector<8x16x384xbf16>
    %40 = vector.shape_cast %39 : vector<8x16x384xbf16> to vector<128x384xbf16>
    %c0_50 = arith.constant 0 : index
    %c0_51 = arith.constant 0 : index
    %41 = vector.load %arg9[%c0_50, %c0_51] : memref<128x128xf32, #tpu.memory_space<vmem>>, vector<128x128xf32>
    %c1_52 = arith.constant 1 : index
    %c0_53 = arith.constant 0 : index
    %c0_54 = arith.constant 0 : index
    %42 = vector.load %arg5[%c1_52, %c0_53, %c0_54] : memref<3x384x128xbf16, #tpu.memory_space<vmem>>, vector<1x384x128xbf16>
    %43 = vector.shape_cast %42 : vector<1x384x128xbf16> to vector<384x128xbf16>
    %cst_55 = arith.constant dense<0.000000e+00> : vector<128x128xf32>
    %44 = tpu.matmul %40, %43, %cst_55 {dimension_numbers = #tpu.dot_dimension_numbers<[1], [0], [0], [1], [0, 0, 1, 1], [], []>} : vector<128x384xbf16>, vector<384x128xbf16>, vector<128x128xf32> -> vector<128x128xf32>
    %45 = arith.addf %41, %44 : vector<128x128xf32>
    %c0_56 = arith.constant 0 : index
    %c0_57 = arith.constant 0 : index
    %46 = vector.load %arg9[%c0_56, %c0_57] : memref<128x128xf32, #tpu.memory_space<vmem>>, vector<128x128xf32>
    tpu.vector_store %arg9[%c0_56, %c0_57], %45 {strides = array<i32>} : memref<128x128xf32, #tpu.memory_space<vmem>>, vector<128x128xf32>,
    %c2 = arith.constant 2 : index
    %c0_58 = arith.constant 0 : index
    %c0_59 = arith.constant 0 : index
    %47 = vector.load %arg8[%c2, %c0_58, %c0_59] : memref<10x16x384xbf16, #tpu.memory_space<vmem>>, vector<8x16x384xbf16>
    %48 = vector.shape_cast %47 : vector<8x16x384xbf16> to vector<128x384xbf16>
    %c0_60 = arith.constant 0 : index
    %c0_61 = arith.constant 0 : index
    %49 = vector.load %arg9[%c0_60, %c0_61] : memref<128x128xf32, #tpu.memory_space<vmem>>, vector<128x128xf32>
    %c2_62 = arith.constant 2 : index
    %c0_63 = arith.constant 0 : index
    %c0_64 = arith.constant 0 : index
    %50 = vector.load %arg5[%c2_62, %c0_63, %c0_64] : memref<3x384x128xbf16, #tpu.memory_space<vmem>>, vector<1x384x128xbf16>
    %51 = vector.shape_cast %50 : vector<1x384x128xbf16> to vector<384x128xbf16>
    %cst_65 = arith.constant dense<0.000000e+00> : vector<128x128xf32>
    %52 = tpu.matmul %48, %51, %cst_65 {dimension_numbers = #tpu.dot_dimension_numbers<[1], [0], [0], [1], [0, 0, 1, 1], [], []>} : vector<128x384xbf16>, vector<384x128xbf16>, vector<128x128xf32> -> vector<128x128xf32>
    %53 = arith.addf %49, %52 : vector<128x128xf32>
    %c0_66 = arith.constant 0 : index
    %c0_67 = arith.constant 0 : index
    %54 = vector.load %arg9[%c0_66, %c0_67] : memref<128x128xf32, #tpu.memory_space<vmem>>, vector<128x128xf32>
    tpu.vector_store %arg9[%c0_66, %c0_67], %53 {strides = array<i32>} : memref<128x128xf32, #tpu.memory_space<vmem>>, vector<128x128xf32>,
    %c0_68 = arith.constant 0 : index
    %c0_69 = arith.constant 0 : index
    %55 = vector.load %arg9[%c0_68, %c0_69] : memref<128x128xf32, #tpu.memory_space<vmem>>, vector<128x128xf32>
    %56 = vector.shape_cast %55 : vector<128x128xf32> to vector<8x16x128xf32>
    %57 = vector.extract_strided_slice %56 {offsets = [0, 0, 0], sizes = [8, 8, 128], strides = [1, 1, 1]} : vector<8x16x128xf32> to vector<8x8x128xf32>
    %c0_70 = arith.constant 0 : index
    %c0_71 = arith.constant 0 : index
    %c0_72 = arith.constant 0 : index
    %c0_73 = arith.constant 0 : index
    %c0_74 = arith.constant 0 : index
    %58 = vector.load %arg7[%c0_70, %c0_71, %c0_72, %c0_73, %c0_74] : memref<1x1x8x8x128xf32, #tpu.memory_space<vmem>>, vector<1x1x8x8x128xf32>
    %59 = vector.shape_cast %58 : vector<1x1x8x8x128xf32> to vector<8x8x128xf32>
    %60 = vector.shape_cast %57 : vector<8x8x128xf32> to vector<1x1x8x8x128xf32>
    tpu.vector_store %arg7[%c0_70, %c0_71, %c0_72, %c0_73, %c0_74], %60 {strides = array<i32>} : memref<1x1x8x8x128xf32, #tpu.memory_space<vmem>>, vector<1x1x8x8x128xf32>,
    return
  }
  func.func @transform_0(%arg0: i32, %arg1: i32) -> (i32, i32, i32, i32, i32) {
    %c0_i32 = arith.constant 0 : i32
    %c0_i32_0 = arith.constant 0 : i32
    %c0_i32_1 = arith.constant 0 : i32
    %c0_i32_2 = arith.constant 0 : i32
    return %arg0, %arg1, %c0_i32, %c0_i32_0, %c0_i32_1 : i32, i32, i32, i32, i32
  }
  func.func @transform_1(%arg0: i32, %arg1: i32) -> (i32, i32, i32, i32, i32) {
    %c1_i32 = arith.constant 1 : i32
    %0 = arith.subi %arg1, %c1_i32 : i32
    %c0_i32 = arith.constant 0 : i32
    %1 = arith.maxsi %0, %c0_i32 : i32
    %c0_i32_0 = arith.constant 0 : i32
    %c0_i32_1 = arith.constant 0 : i32
    %c0_i32_2 = arith.constant 0 : i32
    %c0_i32_3 = arith.constant 0 : i32
    return %arg0, %1, %c0_i32_0, %c0_i32_1, %c0_i32_2 : i32, i32, i32, i32, i32
  }
  func.func @transform_2(%arg0: i32, %arg1: i32) -> (i32, i32, i32, i32, i32) {
    %c1_i32 = arith.constant 1 : i32
    %0 = arith.addi %arg1, %c1_i32 : i32
    %c3_i32 = arith.constant 3 : i32
    %1 = arith.minsi %0, %c3_i32 : i32
    %c0_i32 = arith.constant 0 : i32
    %c0_i32_0 = arith.constant 0 : i32
    %c0_i32_1 = arith.constant 0 : i32
    %c0_i32_2 = arith.constant 0 : i32
    return %arg0, %1, %c0_i32, %c0_i32_0, %c0_i32_1 : i32, i32, i32, i32, i32
  }
  func.func @transform_3(%arg0: i32, %arg1: i32) -> (i32, i32, i32) {
    %c0_i32 = arith.constant 0 : i32
    %c0_i32_0 = arith.constant 0 : i32
    %c0_i32_1 = arith.constant 0 : i32
    %c0_i32_2 = arith.constant 0 : i32
    return %c0_i32, %c0_i32_0, %c0_i32_1 : i32, i32, i32
  }
  func.func @transform_4(%arg0: i32, %arg1: i32) -> (i32, i32) {
    %c0_i32 = arith.constant 0 : i32
    %c0_i32_0 = arith.constant 0 : i32
    %c0_i32_1 = arith.constant 0 : i32
    return %c0_i32, %c0_i32_0 : i32, i32
  }
  func.func @transform_5(%arg0: i32, %arg1: i32) -> (i32, i32, i32, i32, i32) {
    %c0_i32 = arith.constant 0 : i32
    %c0_i32_0 = arith.constant 0 : i32
    %c0_i32_1 = arith.constant 0 : i32
    %c0_i32_2 = arith.constant 0 : i32
    return %arg0, %arg1, %c0_i32, %c0_i32_0, %c0_i32_1 : i32, i32, i32, i32, i32
  }
}

</mosaic_0001>

<llo_original>
// kernel: tpu_custom_call.1
$region0: #{tpu_custom_call.1}
  #allocation0 [shape = 'u32[]', space=smem, size = 0x4, offset = 0x4, fixed_abs, tag = 'smem constant byte address 0x4 - core index']
  #allocation1 [shape = 'u32[144,128]{1,0:T(1,128)}', space=vmem, size = 0x12000, scoped, tag = 'internal scratch']
  #allocation2 [shape = 'bf16[10,16,384]{2,1,0:T(16,128)(2,1)}', space=vmem, size = 0x1e000, scoped, tag = 'scratch operand']
  #allocation3 [shape = 'f32[128,128]{1,0:T(8,128)}', space=vmem, size = 0x10000, scoped, tag = 'scratch operand']
  %s0 = inlined_call_operand.hbm [shape: bf16[2,4,8,8,128], index: 0, kind: input, shape index: {}]
  %s1 = inlined_call_operand.hbm [shape: bf16[2,4,8,8,128], index: 1, kind: input, shape index: {}]
  %s2 = inlined_call_operand.hbm [shape: bf16[2,4,8,8,128], index: 2, kind: input, shape index: {}]
  %s3 = inlined_call_operand.hbm [shape: bf16[3,384,128], index: 3, kind: input, shape index: {}]
  %s4 = inlined_call_operand.vmem [shape: f32[1,128], index: 4, kind: input, shape index: {}]
  %s5 = inlined_call_operand.hbm [shape: f32[2,4,8,8,128], index: 5, kind: output, shape index: {}]
  %s6 = sld [smem:[#allocation0]]
  $region85: #{tpu_custom_call.1} parent=0
    _
  %s8 = ssub.s32 1, %s6
  %s9 = scalar_select 0, %s8, %s6
  $region1: #{tpu_custom_call.1} parent=0
    #allocation4 [shape = 'u8[32768]{0}', space=vmem, size = 0x8000, scoped, tag = 'input window, operand 0']
    #allocation5 [shape = 's32[2]{0}', space=sflag, size = 0x8, scoped, tag = 'scoped memory for tpu_custom_call.1']
    #allocation6 [shape = 's32[2]{0}', space=sflag, size = 0x8, scoped, tag = 'scoped memory for tpu_custom_call.1']
    #allocation7 [shape = 'u8[32768]{0}', space=vmem, size = 0x8000, scoped, tag = 'input window, operand 1']
    #allocation8 [shape = 's32[2]{0}', space=sflag, size = 0x8, scoped, tag = 'scoped memory for tpu_custom_call.1']
    #allocation9 [shape = 'u8[32768]{0}', space=vmem, size = 0x8000, scoped, tag = 'input window, operand 2']
    #allocation10 [shape = 'u8[294912]{0}', space=vmem, size = 0x48000, scoped, tag = 'input window, operand 3, single buffered']
    #allocation11 [shape = 's32[1]{0}', space=sflag, size = 0x4, scoped, tag = 'scoped memory for tpu_custom_call.1']
    #allocation12 [shape = 'u8[65536]{0}', space=vmem, size = 0x10000, scoped, tag = 'output window, operand 0']
    %10 = vsyncpa [#allocation5], 0
    %s11 = scalar_lea.sflag [#allocation5], 1
    %12 = vsyncpa %s11, 0
    %13 = vsyncpa [#allocation8], 0
    %s14 = scalar_lea.sflag [#allocation8], 1
    %15 = vsyncpa %s14, 0
    %16 = vsyncpa [#allocation11], 0
    %17 = vsyncpa [#allocation6], 0
    %s18 = scalar_lea.sflag [#allocation6], 1
    %19 = vsyncpa %s18, 0
    loop: start=0, step=1, limit=10
    $region2: #{tpu_custom_call.1} parent=1 // loop_pre_header
      _
    $region3: #{tpu_custom_call.1} parent=1 // loop_header
      %s21 = sphi 0, %s25
      %p22 = scmp.ge.s32.totalorder %s21, 10
      %s28 = sphi 0, %s40
      %s29 = sphi 0, %s36
      %s30 = sphi 0, %s28
      %s31 = sphi 0, %s29
      %s32 = sphi 0, %s30
      %s33 = sphi 0, %s31
      %s45 = sphi 0, %s47
      %s48 = sphi 0, %s45
      %s49 = sphi 0, %s48
      %s65 = sphi 0, %s49
      %s79 = sphi 0, %s81
      %s82 = sphi 0, %s79
      %s83 = sphi 0, %s82
      %s99 = sphi 0, %s83
      %s113 = sphi 0, %s115
      %s116 = sphi 0, %s113
      %s117 = sphi 0, %s116
      %s133 = sphi 0, %s117
      %s137 = sphi 0, %s137
      %s139 = sphi 0, %s137
      %s140 = sphi 0, %s139
      %s154 = sphi 0, %s140
      %s158 = sphi 0, %s158
      %s160 = sphi 0, %s158
      %s161 = sphi 0, %s160
      %s175 = sphi 0, %s161
      %s183 = sphi 0, %s185
      %s186 = sphi 0, %s183
      %s187 = sphi 0, %s186
      %s203 = sphi 0, %s187
    $region4: #{tpu_custom_call.1} parent=1 // loop_header_branch
      %24 = sbr.rel (%p22) target = $region8
    $region5: #{tpu_custom_call.1} parent=1 // loop_body
      %s26 = ssub.s32 %s21, 1
      %s27 = ssub.s32 %s21, 2
      %s34 = sadd.s32 1, %s29
      %p35 = scmp.ge.s32.totalorder %s34, 4
      %s36 = scalar_select %p35, 0, %s34
      %s37 = sadd.s32 1, %s28
      %s38 = scalar_select %p35, %s37, %s28
      %p39 = scmp.ge.s32.totalorder %s38, 2
      %s40 = scalar_select %p39, 0, %s38
      %s41 = ssub.s32 %s28, %s40
      %s42 = ssub.s32 %s29, %s36
      %s43 = sor.u32 %s41, %s42
      %p44 = scmp.eq.s32.totalorder %s43, 0
      %s46 = sadd.s32 %s45, 1
      %s47 = scalar_select %p44, %s45, %s46
      %p50 = pneg %p44
      %p51 = scmp.eq.s32.totalorder %s21, 7
      %p52 = por %p50, %p51
      %p53 = scmp.ne.s32.totalorder %s45, %s48
      %p54 = scmp.eq.s32.totalorder %s21, 0
      %p55 = por %p53, %p54
      %p56 = scmp.ne.s32.totalorder %s45, %s48
      %p57 = scmp.eq.s32.totalorder %s26, 7
      %p58 = por %p56, %p57
      %p59 = scmp.ne.s32.totalorder %s48, %s49
      %p60 = scmp.eq.s32.totalorder %s26, 0
      %p61 = por %p59, %p60
      %p62 = scmp.ne.s32.totalorder %s48, %s49
      %p63 = scmp.eq.s32.totalorder %s27, 7
      %p64 = por %p62, %p63
      %p66 = scmp.ne.s32.totalorder %s49, %s65
      %p67 = scmp.eq.s32.totalorder %s27, 0
      %p68 = por %p66, %p67
      %s69 = ssub.s32 %s29, 1
      %p70 = scmp.gt.s32.totalorder %s69, 0
      %s71 = scalar_select %p70, %s69, 0
      %s72 = ssub.s32 %s36, 1
      %p73 = scmp.gt.s32.totalorder %s72, 0
      %s74 = scalar_select %p73, %s72, 0
      %s75 = ssub.s32 %s28, %s40
      %s76 = ssub.s32 %s71, %s74
      %s77 = sor.u32 %s75, %s76
      %p78 = scmp.eq.s32.totalorder %s77, 0
      %s80 = sadd.s32 %s79, 1
      %s81 = scalar_select %p78, %s79, %s80
      %p84 = pneg %p78
      %p85 = scmp.eq.s32.totalorder %s21, 7
      %p86 = por %p84, %p85
      %p87 = scmp.ne.s32.totalorder %s79, %s82
      %p88 = scmp.eq.s32.totalorder %s21, 0
      %p89 = por %p87, %p88
      %p90 = scmp.ne.s32.totalorder %s79, %s82
      %p91 = scmp.eq.s32.totalorder %s26, 7
      %p92 = por %p90, %p91
      %p93 = scmp.ne.s32.totalorder %s82, %s83
      %p94 = scmp.eq.s32.totalorder %s26, 0
      %p95 = por %p93, %p94
      %p96 = scmp.ne.s32.totalorder %s82, %s83
      %p97 = scmp.eq.s32.totalorder %s27, 7
      %p98 = por %p96, %p97
      %p100 = scmp.ne.s32.totalorder %s83, %s99
      %p101 = scmp.eq.s32.totalorder %s27, 0
      %p102 = por %p100, %p101
      %s103 = sadd.s32 %s29, 1
      %p104 = scmp.lt.s32.totalorder %s103, 3
      %s105 = scalar_select %p104, %s103, 3
      %s106 = sadd.s32 %s36, 1
      %p107 = scmp.lt.s32.totalorder %s106, 3
      %s108 = scalar_select %p107, %s106, 3
      %s109 = ssub.s32 %s28, %s40
      %s110 = ssub.s32 %s105, %s108
      %s111 = sor.u32 %s109, %s110
      %p112 = scmp.eq.s32.totalorder %s111, 0
      %s114 = sadd.s32 %s113, 1
      %s115 = scalar_select %p112, %s113, %s114
      %p118 = pneg %p112
      %p119 = scmp.eq.s32.totalorder %s21, 7
      %p120 = por %p118, %p119
      %p121 = scmp.ne.s32.totalorder %s113, %s116
      %p122 = scmp.eq.s32.totalorder %s21, 0
      %p123 = por %p121, %p122
      %p124 = scmp.ne.s32.totalorder %s113, %s116
      %p125 = scmp.eq.s32.totalorder %s26, 7
      %p126 = por %p124, %p125
      %p127 = scmp.ne.s32.totalorder %s116, %s117
      %p128 = scmp.eq.s32.totalorder %s26, 0
      %p129 = por %p127, %p128
      %p130 = scmp.ne.s32.totalorder %s116, %s117
      %p131 = scmp.eq.s32.totalorder %s27, 7
      %p132 = por %p130, %p131
      %p134 = scmp.ne.s32.totalorder %s117, %s133
      %p135 = scmp.eq.s32.totalorder %s27, 0
      %p136 = por %p134, %p135
      %s138 = sadd.s32 %s137, 1
      %p141 = scmp.eq.s32.totalorder %s21, 7
      %p142 = scmp.ne.s32.totalorder %s137, %s139
      %p143 = scmp.eq.s32.totalorder %s21, 0
      %p144 = por %p142, %p143
      %p145 = scmp.ne.s32.totalorder %s137, %s139
      %p146 = scmp.eq.s32.totalorder %s26, 7
      %p147 = por %p145, %p146
      %p148 = scmp.ne.s32.totalorder %s139, %s140
      %p149 = scmp.eq.s32.totalorder %s26, 0
      %p150 = por %p148, %p149
      %p151 = scmp.ne.s32.totalorder %s139, %s140
      %p152 = scmp.eq.s32.totalorder %s27, 7
      %p153 = por %p151, %p152
      %p155 = scmp.ne.s32.totalorder %s140, %s154
      %p156 = scmp.eq.s32.totalorder %s27, 0
      %p157 = por %p155, %p156
      %s159 = sadd.s32 %s158, 1
      %p162 = scmp.eq.s32.totalorder %s21, 7
      %p163 = scmp.ne.s32.totalorder %s158, %s160
      %p164 = scmp.eq.s32.totalorder %s21, 0
      %p165 = por %p163, %p164
      %p166 = scmp.ne.s32.totalorder %s158, %s160
      %p167 = scmp.eq.s32.totalorder %s26, 7
      %p168 = por %p166, %p167
      %p169 = scmp.ne.s32.totalorder %s160, %s161
      %p170 = scmp.eq.s32.totalorder %s26, 0
      %p171 = por %p169, %p170
      %p172 = scmp.ne.s32.totalorder %s160, %s161
      %p173 = scmp.eq.s32.totalorder %s27, 7
      %p174 = por %p172, %p173
      %p176 = scmp.ne.s32.totalorder %s161, %s175
      %p177 = scmp.eq.s32.totalorder %s27, 0
      %p178 = por %p176, %p177
      %s179 = ssub.s32 %s28, %s40
      %s180 = ssub.s32 %s29, %s36
      %s181 = sor.u32 %s179, %s180
      %p182 = scmp.eq.s32.totalorder %s181, 0
      %s184 = sadd.s32 %s183, 1
      %s185 = scalar_select %p182, %s183, %s184
      %p188 = pneg %p182
      %p189 = scmp.eq.s32.totalorder %s21, 7
      %p190 = por %p188, %p189
      %p191 = scmp.ne.s32.totalorder %s183, %s186
      %p192 = scmp.eq.s32.totalorder %s21, 0
      %p193 = por %p191, %p192
      %p194 = scmp.ne.s32.totalorder %s183, %s186
      %p195 = scmp.eq.s32.totalorder %s26, 7
      %p196 = por %p194, %p195
      %p197 = scmp.ne.s32.totalorder %s186, %s187
      %p198 = scmp.eq.s32.totalorder %s26, 0
      %p199 = por %p197, %p198
      %p200 = scmp.ne.s32.totalorder %s186, %s187
      %p201 = scmp.eq.s32.totalorder %s27, 7
      %p202 = por %p200, %p201
      %p204 = scmp.ne.s32.totalorder %s187, %s203
      %p205 = scmp.eq.s32.totalorder %s27, 0
      %p206 = por %p204, %p205
      %p207 = scmp.le.s32.totalorder 1, %s21
      %p208 = scmp.lt.s32.totalorder %s21, 9
      %p209 = pnand %p207, %p208
      %p210 = pneg %p209
      // Predicated region
      $region9: #{tpu_custom_call.1} parent=5 // pred_check
        _
      $region10: #{tpu_custom_call.1} parent=5 // pred_check_branch
        %212 = sbr.rel (%p209) target = $region12
      $region11: #{tpu_custom_call.1} parent=5 // pred_region
        %s213 = ssub.s32 %s21, 1
        // Predicated region
        $region13: #{tpu_custom_call.1} parent=11 // pred_check
          %p214 = pneg %p150
        $region14: #{tpu_custom_call.1} parent=11 // pred_check_branch
          %216 = sbr.rel (%p214) target = $region16
        $region15: #{tpu_custom_call.1} parent=11 // pred_region
          %s218 = ssub.s32 9216, 9216
          %219 = vsyncadd [#allocation11], %s218
          %s220 = sshll.u32 [#allocation10], 4
          %s221 = int_to_ptr.vmem [resolvable:$true] %s220
          %226 = dma.hbm_to_vmem [thread:$0]  %s3, 9216, %s221, [#allocation11], 64, 64, 4
        $region16: #{tpu_custom_call.1} parent=11 // pred_fallthru
          _
        // Predicated region
        $region17: #{tpu_custom_call.1} parent=11 // pred_check
          %p227 = pneg %p171
        $region18: #{tpu_custom_call.1} parent=11 // pred_check_branch
          %229 = sbr.rel (%p227) target = $region20
        $region19: #{tpu_custom_call.1} parent=11 // pred_region
          _
        $region20: #{tpu_custom_call.1} parent=11 // pred_fallthru
          _
      $region12: #{tpu_custom_call.1} parent=5 // pred_fallthru
        _
      %p230 = scmp.lt.s32.totalorder %s21, 8
      // Predicated region
      $region21: #{tpu_custom_call.1} parent=5 // pred_check
        %p231 = pneg %p230
      $region22: #{tpu_custom_call.1} parent=5 // pred_check_branch
        %233 = sbr.rel (%p231) target = $region24
      $region23: #{tpu_custom_call.1} parent=5 // pred_region
        // Predicated region
        $region25: #{tpu_custom_call.1} parent=23 // pred_check
          %p234 = pneg %p55
        $region26: #{tpu_custom_call.1} parent=23 // pred_check_branch
          %236 = sbr.rel (%p234) target = $region28
        $region27: #{tpu_custom_call.1} parent=23 // pred_region
          %s237 = sand.u32 %s45, 1
          %s238 = scalar_lea.sflag [#allocation5], %s237
          %s239 = sand.u32 %s45, 1
          %s240 = smul.addr %s239, 32
          %s241 = scalar_lea.vmem [#allocation4], %s240
          %s243 = ssub.s32 512, 512
          %244 = vsyncadd %s238, %s243
          %s245 = smul.addr %s29, 8
          %s246 = smul.addr %s28, 32
          %s247 = sadd.s32 %s245, %s246
          %s248 = smul.addr %s247, 64
          %s249 = scalar_lea.hbm %s0, %s248
          %s250 = sshll.u32 %s241, 4
          %s251 = int_to_ptr.vmem [resolvable:$true] %s250
          %256 = dma.hbm_to_vmem [thread:$0]  %s249, 512, %s251, %s238, 64, 64, 4
        $region28: #{tpu_custom_call.1} parent=23 // pred_fallthru
          _
        // Predicated region
        $region29: #{tpu_custom_call.1} parent=23 // pred_check
          %p257 = pneg %p89
        $region30: #{tpu_custom_call.1} parent=23 // pred_check_branch
          %259 = sbr.rel (%p257) target = $region32
        $region31: #{tpu_custom_call.1} parent=23 // pred_region
          %s260 = sand.u32 %s21, 1
          %s261 = scalar_lea.sflag [#allocation8], %s260
          %s262 = sand.u32 %s79, 1
          %s263 = smul.addr %s262, 32
          %s264 = scalar_lea.vmem [#allocation7], %s263
          %s265 = ssub.s32 %s29, 1
          %p266 = scmp.gt.s32.totalorder %s265, 0
          %s267 = scalar_select %p266, %s265, 0
          %s269 = ssub.s32 512, 512
          %270 = vsyncadd %s261, %s269
          %s271 = smul.addr %s267, 8
          %s272 = smul.addr %s28, 32
          %s273 = sadd.s32 %s271, %s272
          %s274 = smul.addr %s273, 64
          %s275 = scalar_lea.hbm %s1, %s274
          %s276 = sshll.u32 %s264, 4
          %s277 = int_to_ptr.vmem [resolvable:$true] %s276
          %282 = dma.hbm_to_vmem [thread:$0]  %s275, 512, %s277, %s261, 64, 64, 4
        $region32: #{tpu_custom_call.1} parent=23 // pred_fallthru
          _
        // Predicated region
        $region33: #{tpu_custom_call.1} parent=23 // pred_check
          %p283 = pneg %p123
        $region34: #{tpu_custom_call.1} parent=23 // pred_check_branch
          %285 = sbr.rel (%p283) target = $region36
        $region35: #{tpu_custom_call.1} parent=23 // pred_region
          %s286 = sand.u32 %s21, 1
          %s287 = scalar_lea.sflag [#allocation8], %s286
          %s288 = sand.u32 %s113, 1
          %s289 = smul.addr %s288, 32
          %s290 = scalar_lea.vmem [#allocation9], %s289
          %s291 = sadd.s32 %s29, 1
          %p292 = scmp.lt.s32.totalorder %s291, 3
          %s293 = scalar_select %p292, %s291, 3
          %s295 = ssub.s32 512, 512
          %296 = vsyncadd %s287, %s295
          %s297 = smul.addr %s293, 8
          %s298 = smul.addr %s28, 32
          %s299 = sadd.s32 %s297, %s298
          %s300 = smul.addr %s299, 64
          %s301 = scalar_lea.hbm %s2, %s300
          %s302 = sshll.u32 %s290, 4
          %s303 = int_to_ptr.vmem [resolvable:$true] %s302
          %308 = dma.hbm_to_vmem [thread:$0]  %s301, 512, %s303, %s287, 64, 64, 4
        $region36: #{tpu_custom_call.1} parent=23 // pred_fallthru
          _
      $region24: #{tpu_custom_call.1} parent=5 // pred_fallthru
        _
      %p309 = scmp.le.s32.totalorder 1, %s21
      %p310 = scmp.lt.s32.totalorder %s21, 9
      %p311 = pnand %p309, %p310
      %p312 = pneg %p311
      // Predicated region
      $region37: #{tpu_custom_call.1} parent=5 // pred_check
        _
      $region38: #{tpu_custom_call.1} parent=5 // pred_check_branch
        %314 = sbr.rel (%p311) target = $region40
      $region39: #{tpu_custom_call.1} parent=5 // pred_region
        %s315 = ssub.s32 %s21, 1
        %s316 = sand.u32 %s48, 1
        %s317 = scalar_lea.sflag [#allocation5], %s316
        %s318 = sand.u32 %s48, 1
        %s319 = smul.addr %s318, 32
        %s320 = scalar_lea.vmem [#allocation4], %s319
        // Predicated region
        $region41: #{tpu_custom_call.1} parent=39 // pred_check
          %p321 = pneg %p61
        $region42: #{tpu_custom_call.1} parent=39 // pred_check_branch
          %323 = sbr.rel (%p321) target = $region44
        $region43: #{tpu_custom_call.1} parent=39 // pred_region
          %324 = dma.done %s317, 512
        $region44: #{tpu_custom_call.1} parent=39 // pred_fallthru
          _
        %s325 = sand.u32 %s26, 1
        %s326 = scalar_lea.sflag [#allocation8], %s325
        %s327 = sand.u32 %s82, 1
        %s328 = smul.addr %s327, 32
        %s329 = scalar_lea.vmem [#allocation7], %s328
        // Predicated region
        $region45: #{tpu_custom_call.1} parent=39 // pred_check
          %p330 = pneg %p95
        $region46: #{tpu_custom_call.1} parent=39 // pred_check_branch
          %332 = sbr.rel (%p330) target = $region48
        $region47: #{tpu_custom_call.1} parent=39 // pred_region
          %333 = dma.done %s326, 512
        $region48: #{tpu_custom_call.1} parent=39 // pred_fallthru
          _
        %s334 = sand.u32 %s26, 1
        %s335 = scalar_lea.sflag [#allocation8], %s334
        %s336 = sand.u32 %s116, 1
        %s337 = smul.addr %s336, 32
        %s338 = scalar_lea.vmem [#allocation9], %s337
        // Predicated region
        $region49: #{tpu_custom_call.1} parent=39 // pred_check
          %p339 = pneg %p129
        $region50: #{tpu_custom_call.1} parent=39 // pred_check_branch
          %341 = sbr.rel (%p339) target = $region52
        $region51: #{tpu_custom_call.1} parent=39 // pred_region
          %342 = dma.done %s335, 512
        $region52: #{tpu_custom_call.1} parent=39 // pred_fallthru
          _
        // Predicated region
        $region53: #{tpu_custom_call.1} parent=39 // pred_check
          %p343 = pneg %p150
        $region54: #{tpu_custom_call.1} parent=39 // pred_check_branch
          %345 = sbr.rel (%p343) target = $region56
        $region55: #{tpu_custom_call.1} parent=39 // pred_region
          %346 = dma.done [#allocation11], 9216
        $region56: #{tpu_custom_call.1} parent=39 // pred_fallthru
          _
        %s347 = sand.u32 %s48, 1
        %s348 = scalar_lea.sflag [#allocation5], %s347
        %s349 = sand.u32 %s48, 1
        %s350 = smul.addr %s349, 32
        %s351 = scalar_lea.vmem [#allocation4], %s350
        %p352 = pneg %p61
        %p353 = pneg %p58
        %s354 = sand.u32 %s26, 1
        %s355 = scalar_lea.sflag [#allocation8], %s354
        %s356 = sand.u32 %s82, 1
        %s357 = smul.addr %s356, 32
        %s358 = scalar_lea.vmem [#allocation7], %s357
        %p359 = pneg %p95
        %p360 = pneg %p92
        %s361 = sand.u32 %s26, 1
        %s362 = scalar_lea.sflag [#allocation8], %s361
        %s363 = sand.u32 %s116, 1
        %s364 = smul.addr %s363, 32
        %s365 = scalar_lea.vmem [#allocation9], %s364
        %p366 = pneg %p129
        %p367 = pneg %p126
        %p368 = pneg %p150
        %p369 = pneg %p147
        %p370 = pneg %p171
        %p371 = pneg %p168
        %p372 = pneg %p199
        %p373 = pneg %p196
        %s374 = sand.u32 %s186, 1
        %s375 = scalar_lea.sflag [#allocation6], %s374
        %s376 = sand.u32 %s186, 1
        %s377 = smul.addr %s376, 64
        %s378 = scalar_lea.vmem [#allocation12], %s377
        %s379 = ssub.s32 %s31, 1
        %p380 = scmp.gt.s32.totalorder %s379, 0
        %s381 = scalar_select %p380, %s379, 0
        %s382 = sadd.s32 %s31, 1
        %p383 = scmp.lt.s32.totalorder %s382, 3
        %s384 = scalar_select %p383, %s382, 3
        %386 = vst [vmem:[#allocation2] sm:$0xff] 0
        %387 = vst [vmem:[#allocation2 + $0x8] sm:$0xff] 0
        %388 = vst [vmem:[#allocation2 + $0x10] sm:$0xff] 0
        %s389 = scalar_lea.vmem [#allocation2], 216
        %390 = vst [vmem:[%s389] sm:$0xff] 0
        %391 = vst [vmem:[%s389 + $0x8] sm:$0xff] 0
        %392 = vst [vmem:[%s389 + $0x10] sm:$0xff] 0
        %s393 = scalar_lea.vmem [#allocation2], 24
        %vm394 = vcmask 1040384
        %vm395 = vsmask.f32 256
        %vm396 = vmand %vm394, %vm395
        %v397 = vld [vmem:[%s393] sm:$0x1]
        %v398 = vsel %vm396, 0, %v397
        %399 = vst [vmem:[%s393] sm:$0x1] %v398
        %v400 = vld [vmem:[%s393 + $0x18] sm:$0x1]
        %v401 = vsel %vm396, 0, %v400
        %402 = vst [vmem:[%s393 + $0x18] sm:$0x1] %v401
        %v403 = vld [vmem:[%s393 + $0x30] sm:$0x1]
        %v404 = vsel %vm396, 0, %v403
        %405 = vst [vmem:[%s393 + $0x30] sm:$0x1] %v404
        %v406 = vld [vmem:[%s393 + $0x48] sm:$0x1]
        %v407 = vsel %vm396, 0, %v406
        %408 = vst [vmem:[%s393 + $0x48] sm:$0x1] %v407
        %v409 = vld [vmem:[%s393 + $0x60] sm:$0x1]
        %v410 = vsel %vm396, 0, %v409
        %411 = vst [vmem:[%s393 + $0x60] sm:$0x1] %v410
        %v412 = vld [vmem:[%s393 + $0x78] sm:$0x1]
        %v413 = vsel %vm396, 0, %v412
        %414 = vst [vmem:[%s393 + $0x78] sm:$0x1] %v413
        %v415 = vld [vmem:[%s393 + $0x90] sm:$0x1]
        %v416 = vsel %vm396, 0, %v415
        %417 = vst [vmem:[%s393 + $0x90] sm:$0x1] %v416
        %v418 = vld [vmem:[%s393 + $0xa8] sm:$0x1]
        %v419 = vsel %vm396, 0, %v418
        %420 = vst [vmem:[%s393 + $0xa8] sm:$0x1] %v419
        %vm421 = vcmask 1043459
        %vm422 = vsmask.f32 7950
        %vm423 = vmand %vm421, %vm422
        %v424 = vld [vmem:[%s393 + $0x10] sm:$0x8]
        %v425 = vsel %vm423, 0, %v424
        %426 = vst [vmem:[%s393 + $0x10] sm:$0x8] %v425
        %v427 = vld [vmem:[%s393 + $0x28] sm:$0x8]
        %v428 = vsel %vm423, 0, %v427
        %429 = vst [vmem:[%s393 + $0x28] sm:$0x8] %v428
        %v430 = vld [vmem:[%s393 + $0x40] sm:$0x8]
        %v431 = vsel %vm423, 0, %v430
        %432 = vst [vmem:[%s393 + $0x40] sm:$0x8] %v431
        %v433 = vld [vmem:[%s393 + $0x58] sm:$0x8]
        %v434 = vsel %vm423, 0, %v433
        %435 = vst [vmem:[%s393 + $0x58] sm:$0x8] %v434
        %v436 = vld [vmem:[%s393 + $0x70] sm:$0x8]
        %v437 = vsel %vm423, 0, %v436
        %438 = vst [vmem:[%s393 + $0x70] sm:$0x8] %v437
        %v439 = vld [vmem:[%s393 + $0x88] sm:$0x8]
        %v440 = vsel %vm423, 0, %v439
        %441 = vst [vmem:[%s393 + $0x88] sm:$0x8] %v440
        %v442 = vld [vmem:[%s393 + $0xa0] sm:$0x8]
        %v443 = vsel %vm423, 0, %v442
        %444 = vst [vmem:[%s393 + $0xa0] sm:$0x8] %v443
        %v445 = vld [vmem:[%s393 + $0xb8] sm:$0x8]
        %v446 = vsel %vm423, 0, %v445
        %447 = vst [vmem:[%s393 + $0xb8] sm:$0x8] %v446
        %v448 = vld [vmem:[%s320] sm:$0xf]
        %v449 = vld [vmem:[%s320 + $0x4] sm:$0xf]
        %v450 = vld [vmem:[%s320 + $0x8] sm:$0xf]
        %v451 = vld [vmem:[%s320 + $0xc] sm:$0xf]
        %v452 = vld [vmem:[%s320 + $0x10] sm:$0xf]
        %v453 = vld [vmem:[%s320 + $0x14] sm:$0xf]
        %v454 = vld [vmem:[%s320 + $0x18] sm:$0xf]
        %v455 = vld [vmem:[%s320 + $0x1c] sm:$0xf]
        %456 = vst [vmem:[%s393 + $0x8] sm:$0xf] %v448
        %457 = vst [vmem:[%s393 + $0x20] sm:$0xf] %v449
        %458 = vst [vmem:[%s393 + $0x38] sm:$0xf] %v450
        %459 = vst [vmem:[%s393 + $0x50] sm:$0xf] %v451
        %460 = vst [vmem:[%s393 + $0x68] sm:$0xf] %v452
        %461 = vst [vmem:[%s393 + $0x80] sm:$0xf] %v453
        %462 = vst [vmem:[%s393 + $0x98] sm:$0xf] %v454
        %463 = vst [vmem:[%s393 + $0xb0] sm:$0xf] %v455
        %p464 = scmp.lt.s32.totalorder %s31, 3
        // Predicated region
        $region57: #{tpu_custom_call.1} parent=39 // pred_check
          %p465 = pneg %p464
        $region58: #{tpu_custom_call.1} parent=39 // pred_check_branch
          %467 = sbr.rel (%p465) target = $region60
        $region59: #{tpu_custom_call.1} parent=39 // pred_region
          %v468 = vld [vmem:[%s338] sm:$0xf]
          %v469 = vld [vmem:[%s338 + $0x4] sm:$0xf]
          %v470 = vld [vmem:[%s338 + $0x8] sm:$0xf]
          %v471 = vld [vmem:[%s338 + $0xc] sm:$0xf]
          %v472 = vld [vmem:[%s338 + $0x10] sm:$0xf]
          %v473 = vld [vmem:[%s338 + $0x14] sm:$0xf]
          %v474 = vld [vmem:[%s338 + $0x18] sm:$0xf]
          %v475 = vld [vmem:[%s338 + $0x1c] sm:$0xf]
          %vm476 = vcmask 11264
          %477 = vst.msk [vmem:[%s393 + $0x8] sm:$0xf] %vm476, %v468
          %478 = vst.msk [vmem:[%s393 + $0x20] sm:$0xf] %vm476, %v469
          %479 = vst.msk [vmem:[%s393 + $0x38] sm:$0xf] %vm476, %v470
          %480 = vst.msk [vmem:[%s393 + $0x50] sm:$0xf] %vm476, %v471
          %481 = vst.msk [vmem:[%s393 + $0x68] sm:$0xf] %vm476, %v472
          %482 = vst.msk [vmem:[%s393 + $0x80] sm:$0xf] %vm476, %v473
          %483 = vst.msk [vmem:[%s393 + $0x98] sm:$0xf] %vm476, %v474
          %484 = vst.msk [vmem:[%s393 + $0xb0] sm:$0xf] %vm476, %v475
        $region60: #{tpu_custom_call.1} parent=39 // pred_fallthru
          _
        %p485 = scmp.eq.s32.totalorder %s31, 3
        // Predicated region
        $region61: #{tpu_custom_call.1} parent=39 // pred_check
          %p486 = pneg %p485
        $region62: #{tpu_custom_call.1} parent=39 // pred_check_branch
          %488 = sbr.rel (%p486) target = $region64
        $region63: #{tpu_custom_call.1} parent=39 // pred_region
          %vm489 = vcmask 11264
          %490 = vst.msk [vmem:[%s393 + $0x8] sm:$0xf] %vm489, 0
          %491 = vst.msk [vmem:[%s393 + $0x20] sm:$0xf] %vm489, 0
          %492 = vst.msk [vmem:[%s393 + $0x38] sm:$0xf] %vm489, 0
          %493 = vst.msk [vmem:[%s393 + $0x50] sm:$0xf] %vm489, 0
          %494 = vst.msk [vmem:[%s393 + $0x68] sm:$0xf] %vm489, 0
          %495 = vst.msk [vmem:[%s393 + $0x80] sm:$0xf] %vm489, 0
          %496 = vst.msk [vmem:[%s393 + $0x98] sm:$0xf] %vm489, 0
          %497 = vst.msk [vmem:[%s393 + $0xb0] sm:$0xf] %vm489, 0
        $region64: #{tpu_custom_call.1} parent=39 // pred_fallthru
          _
        %p498 = scmp.gt.s32.totalorder %s31, 0
        // Predicated region
        $region65: #{tpu_custom_call.1} parent=39 // pred_check
          %p499 = pneg %p498
        $region66: #{tpu_custom_call.1} parent=39 // pred_check_branch
          %501 = sbr.rel (%p499) target = $region68
        $region67: #{tpu_custom_call.1} parent=39 // pred_region
          %v502 = vld [vmem:[%s329] sm:$0xf]
          %v503 = vld [vmem:[%s329 + $0x4] sm:$0xf]
          %v504 = vld [vmem:[%s329 + $0x8] sm:$0xf]
          %v505 = vld [vmem:[%s329 + $0xc] sm:$0xf]
          %v506 = vld [vmem:[%s329 + $0x10] sm:$0xf]
          %v507 = vld [vmem:[%s329 + $0x14] sm:$0xf]
          %v508 = vld [vmem:[%s329 + $0x18] sm:$0xf]
          %v509 = vld [vmem:[%s329 + $0x1c] sm:$0xf]
          %vm510 = vcmask 27664
          %511 = vst.msk [vmem:[%s393 + $0x8] sm:$0xf] %vm510, %v502
          %512 = vst.msk [vmem:[%s393 + $0x20] sm:$0xf] %vm510, %v503
          %513 = vst.msk [vmem:[%s393 + $0x38] sm:$0xf] %vm510, %v504
          %514 = vst.msk [vmem:[%s393 + $0x50] sm:$0xf] %vm510, %v505
          %515 = vst.msk [vmem:[%s393 + $0x68] sm:$0xf] %vm510, %v506
          %516 = vst.msk [vmem:[%s393 + $0x80] sm:$0xf] %vm510, %v507
          %517 = vst.msk [vmem:[%s393 + $0x98] sm:$0xf] %vm510, %v508
          %518 = vst.msk [vmem:[%s393 + $0xb0] sm:$0xf] %vm510, %v509
        $region68: #{tpu_custom_call.1} parent=39 // pred_fallthru
          _
        %p519 = scmp.eq.s32.totalorder %s31, 0
        // Predicated region
        $region69: #{tpu_custom_call.1} parent=39 // pred_check
          %p520 = pneg %p519
        $region70: #{tpu_custom_call.1} parent=39 // pred_check_branch
          %522 = sbr.rel (%p520) target = $region72
        $region71: #{tpu_custom_call.1} parent=39 // pred_region
          %vm523 = vcmask 27664
          %524 = vst.msk [vmem:[%s393 + $0x8] sm:$0xf] %vm523, 0
          %525 = vst.msk [vmem:[%s393 + $0x20] sm:$0xf] %vm523, 0
          %526 = vst.msk [vmem:[%s393 + $0x38] sm:$0xf] %vm523, 0
          %527 = vst.msk [vmem:[%s393 + $0x50] sm:$0xf] %vm523, 0
          %528 = vst.msk [vmem:[%s393 + $0x68] sm:$0xf] %vm523, 0
          %529 = vst.msk [vmem:[%s393 + $0x80] sm:$0xf] %vm523, 0
          %530 = vst.msk [vmem:[%s393 + $0x98] sm:$0xf] %vm523, 0
          %531 = vst.msk [vmem:[%s393 + $0xb0] sm:$0xf] %vm523, 0
        $region72: #{tpu_custom_call.1} parent=39 // pred_fallthru
          _
        %v532 = vld [vmem:[%s393 + $0x8] sm:$0xf]
        %v533 = vld [vmem:[%s393 + $0x20] sm:$0xf]
        %v534 = vld [vmem:[%s393 + $0x38] sm:$0xf]
        %v535 = vld [vmem:[%s393 + $0x50] sm:$0xf]
        %v536 = vld [vmem:[%s393 + $0x68] sm:$0xf]
        %v537 = vld [vmem:[%s393 + $0x80] sm:$0xf]
        %v538 = vld [vmem:[%s393 + $0x98] sm:$0xf]
        %v539 = vld [vmem:[%s393 + $0xb0] sm:$0xf]
        %v541 = vshrl.u32 %v532, 16
        %v543 = vrot.slane %v541, 7
        %v544 = vshll.u32 %v532, 16
        %v546 = vor.u32 %v543, %v544
        %v548 = vshrl.u32 %v533, 16
        %v550 = vrot.slane %v548, 7
        %v551 = vshll.u32 %v533, 16
        %v553 = vor.u32 %v550, %v551
        %v555 = vshrl.u32 %v534, 16
        %v557 = vrot.slane %v555, 7
        %v558 = vshll.u32 %v534, 16
        %v560 = vor.u32 %v557, %v558
        %v562 = vshrl.u32 %v535, 16
        %v564 = vrot.slane %v562, 7
        %v565 = vshll.u32 %v535, 16
        %v567 = vor.u32 %v564, %v565
        %v569 = vshrl.u32 %v536, 16
        %v571 = vrot.slane %v569, 7
        %v572 = vshll.u32 %v536, 16
        %v574 = vor.u32 %v571, %v572
        %v576 = vshrl.u32 %v537, 16
        %v578 = vrot.slane %v576, 7
        %v579 = vshll.u32 %v537, 16
        %v581 = vor.u32 %v578, %v579
        %v583 = vshrl.u32 %v538, 16
        %v585 = vrot.slane %v583, 7
        %v586 = vshll.u32 %v538, 16
        %v588 = vor.u32 %v585, %v586
        %v590 = vshrl.u32 %v539, 16
        %v592 = vrot.slane %v590, 7
        %v593 = vshll.u32 %v539, 16
        %v595 = vor.u32 %v592, %v593
        %vm604 = vcmask 1044480
        %vm605 = vsmask.f32 4354
        %vm606 = vmand %vm604, %vm605
        %v607 = vld [vmem:[%s393] sm:$0x1f]
        %v608 = vsel %vm606, %v546, %v607
        %609 = vst [vmem:[%s393] sm:$0x1f] %v608
        %v610 = vld [vmem:[%s393 + $0x18] sm:$0x1f]
        %v611 = vsel %vm606, %v553, %v610
        %612 = vst [vmem:[%s393 + $0x18] sm:$0x1f] %v611
        %v613 = vld [vmem:[%s393 + $0x30] sm:$0x1f]
        %v614 = vsel %vm606, %v560, %v613
        %615 = vst [vmem:[%s393 + $0x30] sm:$0x1f] %v614
        %v616 = vld [vmem:[%s393 + $0x48] sm:$0x1f]
        %v617 = vsel %vm606, %v567, %v616
        %618 = vst [vmem:[%s393 + $0x48] sm:$0x1f] %v617
        %v619 = vld [vmem:[%s393 + $0x60] sm:$0x1f]
        %v620 = vsel %vm606, %v574, %v619
        %621 = vst [vmem:[%s393 + $0x60] sm:$0x1f] %v620
        %v622 = vld [vmem:[%s393 + $0x78] sm:$0x1f]
        %v623 = vsel %vm606, %v581, %v622
        %624 = vst [vmem:[%s393 + $0x78] sm:$0x1f] %v623
        %v625 = vld [vmem:[%s393 + $0x90] sm:$0x1f]
        %v626 = vsel %vm606, %v588, %v625
        %627 = vst [vmem:[%s393 + $0x90] sm:$0x1f] %v626
        %v628 = vld [vmem:[%s393 + $0xa8] sm:$0x1f]
        %v629 = vsel %vm606, %v595, %v628
        %630 = vst [vmem:[%s393 + $0xa8] sm:$0x1f] %v629
        %v631 = vrot.slane %v544, 1
        %v632 = vor.u32 %v541, %v631
        %v633 = vrot.slane %v551, 1
        %v634 = vor.u32 %v548, %v633
        %v635 = vrot.slane %v558, 1
        %v636 = vor.u32 %v555, %v635
        %v637 = vrot.slane %v565, 1
        %v638 = vor.u32 %v562, %v637
        %v639 = vrot.slane %v572, 1
        %v640 = vor.u32 %v569, %v639
        %v641 = vrot.slane %v579, 1
        %v642 = vor.u32 %v576, %v641
        %v643 = vrot.slane %v586, 1
        %v644 = vor.u32 %v583, %v643
        %v645 = vrot.slane %v593, 1
        %v646 = vor.u32 %v590, %v645
        %vm655 = vcmask 1043456
        %vm656 = vsmask.f32 3328
        %vm657 = vmand %vm655, %vm656
        %v658 = vld [vmem:[%s393 + $0x10] sm:$0xf]
        %v659 = vsel %vm657, %v632, %v658
        %660 = vst [vmem:[%s393 + $0x10] sm:$0xf] %v659
        %v661 = vld [vmem:[%s393 + $0x28] sm:$0xf]
        %v662 = vsel %vm657, %v634, %v661
        %663 = vst [vmem:[%s393 + $0x28] sm:$0xf] %v662
        %v664 = vld [vmem:[%s393 + $0x40] sm:$0xf]
        %v665 = vsel %vm657, %v636, %v664
        %666 = vst [vmem:[%s393 + $0x40] sm:$0xf] %v665
        %v667 = vld [vmem:[%s393 + $0x58] sm:$0xf]
        %v668 = vsel %vm657, %v638, %v667
        %669 = vst [vmem:[%s393 + $0x58] sm:$0xf] %v668
        %v670 = vld [vmem:[%s393 + $0x70] sm:$0xf]
        %v671 = vsel %vm657, %v640, %v670
        %672 = vst [vmem:[%s393 + $0x70] sm:$0xf] %v671
        %v673 = vld [vmem:[%s393 + $0x88] sm:$0xf]
        %v674 = vsel %vm657, %v642, %v673
        %675 = vst [vmem:[%s393 + $0x88] sm:$0xf] %v674
        %v676 = vld [vmem:[%s393 + $0xa0] sm:$0xf]
        %v677 = vsel %vm657, %v644, %v676
        %678 = vst [vmem:[%s393 + $0xa0] sm:$0xf] %v677
        %v679 = vld [vmem:[%s393 + $0xb8] sm:$0xf]
        %v680 = vsel %vm657, %v646, %v679
        %681 = vst [vmem:[%s393 + $0xb8] sm:$0xf] %v680
        %v682 = vld [vmem:[%s4] sm:$0x1]
        %v684 = vlaneseq
        %v685 = vshrl.u32 %v684, 7
        %v686 = vsub.s32 0, %v685
        %v687 = vrot.slane %v682, %v686
        %689 = vst [vmem:[#allocation3] sm:$0xff] %v687
        %690 = vst [vmem:[#allocation3 + $0x8] sm:$0xff] %v687
        %691 = vst [vmem:[#allocation3 + $0x10] sm:$0xff] %v687
        %692 = vst [vmem:[#allocation3 + $0x18] sm:$0xff] %v687
        %693 = vst [vmem:[#allocation3 + $0x20] sm:$0xff] %v687
        %694 = vst [vmem:[#allocation3 + $0x28] sm:$0xff] %v687
        %695 = vst [vmem:[#allocation3 + $0x30] sm:$0xff] %v687
        %696 = vst [vmem:[#allocation3 + $0x38] sm:$0xff] %v687
        %697 = vst [vmem:[#allocation3 + $0x40] sm:$0xff] %v687
        %698 = vst [vmem:[#allocation3 + $0x48] sm:$0xff] %v687
        %699 = vst [vmem:[#allocation3 + $0x50] sm:$0xff] %v687
        %700 = vst [vmem:[#allocation3 + $0x58] sm:$0xff] %v687
        %701 = vst [vmem:[#allocation3 + $0x60] sm:$0xff] %v687
        %702 = vst [vmem:[#allocation3 + $0x68] sm:$0xff] %v687
        %703 = vst [vmem:[#allocation3 + $0x70] sm:$0xff] %v687
        %704 = vst [vmem:[#allocation3 + $0x78] sm:$0xff] %v687
        %v705 = vld [vmem:[#allocation2] sm:$0xff]
        %v706 = vld [vmem:[#allocation2 + $0x8] sm:$0xff]
        %v707 = vld [vmem:[#allocation2 + $0x10] sm:$0xff]
        %v708 = vld [vmem:[#allocation2 + $0x18] sm:$0xff]
        %v709 = vld [vmem:[#allocation2 + $0x20] sm:$0xff]
        %v710 = vld [vmem:[#allocation2 + $0x28] sm:$0xff]
        %v711 = vld [vmem:[#allocation2 + $0x30] sm:$0xff]
        %v712 = vld [vmem:[#allocation2 + $0x38] sm:$0xff]
        %v713 = vld [vmem:[#allocation2 + $0x40] sm:$0xff]
        %v714 = vld [vmem:[#allocation2 + $0x48] sm:$0xff]
        %v715 = vld [vmem:[#allocation2 + $0x50] sm:$0xff]
        %v716 = vld [vmem:[#allocation2 + $0x58] sm:$0xff]
        %v717 = vld [vmem:[#allocation2 + $0x60] sm:$0xff]
        %v718 = vld [vmem:[#allocation2 + $0x68] sm:$0xff]
        %v719 = vld [vmem:[#allocation2 + $0x70] sm:$0xff]
        %v720 = vld [vmem:[#allocation2 + $0x78] sm:$0xff]
        %v721 = vld [vmem:[#allocation2 + $0x80] sm:$0xff]
        %v722 = vld [vmem:[#allocation2 + $0x88] sm:$0xff]
        %v723 = vld [vmem:[#allocation2 + $0x90] sm:$0xff]
        %v724 = vld [vmem:[#allocation2 + $0x98] sm:$0xff]
        %v725 = vld [vmem:[#allocation2 + $0xa0] sm:$0xff]
        %v726 = vld [vmem:[#allocation2 + $0xa8] sm:$0xff]
        %v727 = vld [vmem:[#allocation2 + $0xb0] sm:$0xff]
        %v728 = vld [vmem:[#allocation2 + $0xb8] sm:$0xff]
        %v729 = vld [vmem:[#allocation3] sm:$0xff]
        %v730 = vld [vmem:[#allocation3 + $0x8] sm:$0xff]
        %v731 = vld [vmem:[#allocation3 + $0x10] sm:$0xff]
        %v732 = vld [vmem:[#allocation3 + $0x18] sm:$0xff]
        %v733 = vld [vmem:[#allocation3 + $0x20] sm:$0xff]
        %v734 = vld [vmem:[#allocation3 + $0x28] sm:$0xff]
        %v735 = vld [vmem:[#allocation3 + $0x30] sm:$0xff]
        %v736 = vld [vmem:[#allocation3 + $0x38] sm:$0xff]
        %v737 = vld [vmem:[#allocation3 + $0x40] sm:$0xff]
        %v738 = vld [vmem:[#allocation3 + $0x48] sm:$0xff]
        %v739 = vld [vmem:[#allocation3 + $0x50] sm:$0xff]
        %v740 = vld [vmem:[#allocation3 + $0x58] sm:$0xff]
        %v741 = vld [vmem:[#allocation3 + $0x60] sm:$0xff]
        %v742 = vld [vmem:[#allocation3 + $0x68] sm:$0xff]
        %v743 = vld [vmem:[#allocation3 + $0x70] sm:$0xff]
        %v744 = vld [vmem:[#allocation3 + $0x78] sm:$0xff]
        %v745 = vld [vmem:[#allocation10] sm:$0xf]
        %v746 = vld [vmem:[#allocation10 + $0x4] sm:$0xf]
        %v747 = vld [vmem:[#allocation10 + $0x8] sm:$0xf]
        %v748 = vld [vmem:[#allocation10 + $0xc] sm:$0xf]
        %v749 = vld [vmem:[#allocation10 + $0x10] sm:$0xf]
        %v750 = vld [vmem:[#allocation10 + $0x14] sm:$0xf]
        %v751 = vld [vmem:[#allocation10 + $0x18] sm:$0xf]
        %v752 = vld [vmem:[#allocation10 + $0x1c] sm:$0xf]
        %v753 = vld [vmem:[#allocation10 + $0x20] sm:$0xf]
        %v754 = vld [vmem:[#allocation10 + $0x24] sm:$0xf]
        %v755 = vld [vmem:[#allocation10 + $0x28] sm:$0xf]
        %v756 = vld [vmem:[#allocation10 + $0x2c] sm:$0xf]
        %v757 = vld [vmem:[#allocation10 + $0x30] sm:$0xf]
        %v758 = vld [vmem:[#allocation10 + $0x34] sm:$0xf]
        %v759 = vld [vmem:[#allocation10 + $0x38] sm:$0xf]
        %v760 = vld [vmem:[#allocation10 + $0x3c] sm:$0xf]
        %v761 = vld [vmem:[#allocation10 + $0x40] sm:$0xf]
        %v762 = vld [vmem:[#allocation10 + $0x44] sm:$0xf]
        %v763 = vld [vmem:[#allocation10 + $0x48] sm:$0xf]
        %v764 = vld [vmem:[#allocation10 + $0x4c] sm:$0xf]
        %v765 = vld [vmem:[#allocation10 + $0x50] sm:$0xf]
        %v766 = vld [vmem:[#allocation10 + $0x54] sm:$0xf]
        %v767 = vld [vmem:[#allocation10 + $0x58] sm:$0xf]
        %v768 = vld [vmem:[#allocation10 + $0x5c] sm:$0xf]
        %v769 = vld [vmem:[#allocation10 + $0x60] sm:$0xf]
        %v770 = vld [vmem:[#allocation10 + $0x64] sm:$0xf]
        %v771 = vld [vmem:[#allocation10 + $0x68] sm:$0xf]
        %v772 = vld [vmem:[#allocation10 + $0x6c] sm:$0xf]
        %v773 = vld [vmem:[#allocation10 + $0x70] sm:$0xf]
        %v774 = vld [vmem:[#allocation10 + $0x74] sm:$0xf]
        %v775 = vld [vmem:[#allocation10 + $0x78] sm:$0xf]
        %v776 = vld [vmem:[#allocation10 + $0x7c] sm:$0xf]
        %v777 = vld [vmem:[#allocation10 + $0x80] sm:$0xf]
        %v778 = vld [vmem:[#allocation10 + $0x84] sm:$0xf]
        %v779 = vld [vmem:[#allocation10 + $0x88] sm:$0xf]
        %v780 = vld [vmem:[#allocation10 + $0x8c] sm:$0xf]
        %v781 = vld [vmem:[#allocation10 + $0x90] sm:$0xf]
        %v782 = vld [vmem:[#allocation10 + $0x94] sm:$0xf]
        %v783 = vld [vmem:[#allocation10 + $0x98] sm:$0xf]
        %v784 = vld [vmem:[#allocation10 + $0x9c] sm:$0xf]
        %v785 = vld [vmem:[#allocation10 + $0xa0] sm:$0xf]
        %v786 = vld [vmem:[#allocation10 + $0xa4] sm:$0xf]
        %v787 = vld [vmem:[#allocation10 + $0xa8] sm:$0xf]
        %v788 = vld [vmem:[#allocation10 + $0xac] sm:$0xf]
        %v789 = vld [vmem:[#allocation10 + $0xb0] sm:$0xf]
        %v790 = vld [vmem:[#allocation10 + $0xb4] sm:$0xf]
        %v791 = vld [vmem:[#allocation10 + $0xb8] sm:$0xf]
        %v792 = vld [vmem:[#allocation10 + $0xbc] sm:$0xf]
        %v841 = vunpack.c.l.b16 %v745
        %v842 = vunpack.c.l.b16 %v746
        %v843 = vunpack.c.l.b16 %v747
        %v844 = vunpack.c.l.b16 %v748
        %v845 = vunpack.c.l.b16 %v749
        %v846 = vunpack.c.l.b16 %v750
        %v847 = vunpack.c.l.b16 %v751
        %v848 = vunpack.c.l.b16 %v752
        %v849 = vunpack.c.l.b16 %v753
        %v850 = vunpack.c.l.b16 %v754
        %v851 = vunpack.c.l.b16 %v755
        %v852 = vunpack.c.l.b16 %v756
        %v853 = vunpack.c.l.b16 %v757
        %v854 = vunpack.c.l.b16 %v758
        %v855 = vunpack.c.l.b16 %v759
        %v856 = vunpack.c.l.b16 %v760
        %v857 = vunpack.c.l.b16 %v761
        %v858 = vunpack.c.l.b16 %v762
        %v859 = vunpack.c.l.b16 %v763
        %v860 = vunpack.c.l.b16 %v764
        %v861 = vunpack.c.l.b16 %v765
        %v862 = vunpack.c.l.b16 %v766
        %v863 = vunpack.c.l.b16 %v767
        %v864 = vunpack.c.l.b16 %v768
        %v865 = vunpack.c.l.b16 %v769
        %v866 = vunpack.c.l.b16 %v770
        %v867 = vunpack.c.l.b16 %v771
        %v868 = vunpack.c.l.b16 %v772
        %v869 = vunpack.c.l.b16 %v773
        %v870 = vunpack.c.l.b16 %v774
        %v871 = vunpack.c.l.b16 %v775
        %v872 = vunpack.c.l.b16 %v776
        %v873 = vunpack.c.l.b16 %v777
        %v874 = vunpack.c.l.b16 %v778
        %v875 = vunpack.c.l.b16 %v779
        %v876 = vunpack.c.l.b16 %v780
        %v877 = vunpack.c.l.b16 %v781
        %v878 = vunpack.c.l.b16 %v782
        %v879 = vunpack.c.l.b16 %v783
        %v880 = vunpack.c.l.b16 %v784
        %v881 = vunpack.c.l.b16 %v785
        %v882 = vunpack.c.l.b16 %v786
        %v883 = vunpack.c.l.b16 %v787
        %v884 = vunpack.c.l.b16 %v788
        %v885 = vunpack.c.l.b16 %v789
        %v886 = vunpack.c.l.b16 %v790
        %v887 = vunpack.c.l.b16 %v791
        %v888 = vunpack.c.l.b16 %v792
        %v889 = vpack.c.b16 %v842, %v841
        %v890 = vpack.c.b16 %v844, %v843
        %v891 = vpack.c.b16 %v846, %v845
        %v892 = vpack.c.b16 %v848, %v847
        %v893 = vpack.c.b16 %v850, %v849
        %v894 = vpack.c.b16 %v852, %v851
        %v895 = vpack.c.b16 %v854, %v853
        %v896 = vpack.c.b16 %v856, %v855
        %v897 = vpack.c.b16 %v858, %v857
        %v898 = vpack.c.b16 %v860, %v859
        %v899 = vpack.c.b16 %v862, %v861
        %v900 = vpack.c.b16 %v864, %v863
        %v901 = vpack.c.b16 %v866, %v865
        %v902 = vpack.c.b16 %v868, %v867
        %v903 = vpack.c.b16 %v870, %v869
        %v904 = vpack.c.b16 %v872, %v871
        %v905 = vpack.c.b16 %v874, %v873
        %v906 = vpack.c.b16 %v876, %v875
        %v907 = vpack.c.b16 %v878, %v877
        %v908 = vpack.c.b16 %v880, %v879
        %v909 = vpack.c.b16 %v882, %v881
        %v910 = vpack.c.b16 %v884, %v883
        %v911 = vpack.c.b16 %v886, %v885
        %v912 = vpack.c.b16 %v888, %v887
        %937 = vmatprep.subr.bf16.mxu0 0
        %938 = vmatpush1.bf16.msra.mxu0 %v889
        %939 = vmatprep.subr.bf16.mxu0 0
        %940 = vmatpush1.bf16.msra.mxu0 %v890
        %941 = vmatprep.subr.bf16.mxu0 0
        %942 = vmatpush1.bf16.msra.mxu0 %v891
        %943 = vmatprep.subr.bf16.mxu0 0
        %944 = vmatpush1.bf16.msra.mxu0 %v892
        %945 = vmatprep.subr.bf16.mxu0 0
        %946 = vmatpush1.bf16.msra.mxu0 %v893
        %947 = vmatprep.subr.bf16.mxu0 0
        %948 = vmatpush1.bf16.msra.mxu0 %v894
        %949 = vmatprep.subr.bf16.mxu0 0
        %950 = vmatpush1.bf16.msra.mxu0 %v895
        %951 = vmatprep.subr.bf16.mxu0 0
        %952 = vmatpush1.bf16.msra.mxu0 %v896
        %953 = vmatprep.subr.bf16.mxu0 0
        %954 = vmatpush1.bf16.msra.mxu0 %v897
        %955 = vmatprep.subr.bf16.mxu0 0
        %956 = vmatpush1.bf16.msra.mxu0 %v898
        %957 = vmatprep.subr.bf16.mxu0 0
        %958 = vmatpush1.bf16.msra.mxu0 %v899
        %959 = vmatprep.subr.bf16.mxu0 0
        %960 = vmatpush1.bf16.msra.mxu0 %v900
        %961 = vmatprep.subr.bf16.mxu0 0
        %962 = vmatpush1.bf16.msra.mxu0 %v901
        %963 = vmatprep.subr.bf16.mxu0 0
        %964 = vmatpush1.bf16.msra.mxu0 %v902
        %965 = vmatprep.subr.bf16.mxu0 0
        %966 = vmatpush1.bf16.msra.mxu0 %v903
        %967 = vmatprep.subr.bf16.mxu0 0
        %968 = vmatpush1.bf16.msra.mxu0 %v904
        %969 = vmatprep.mubr.bf16.mxu0 %v706
        %970 = vmatmul.mubr.bf16.gmra.mrb[0].mxu0 %v705
        %v971 = vpop.f32.mrb[0].mxu0
        %v972 = vadd.f32 0.0, %v971
        %v973 = vpop.f32.mrb[0].mxu0
        %v974 = vpop.f32.mrb[0].mxu0
        %v975 = vadd.f32 0.0, %v974
        %v976 = vpop.f32.mrb[0].mxu0
        %977 = vmatprep.mubr.bf16.mxu0 %v709
        %978 = vmatmul.mubr.bf16.gmra.mrb[0].mxu0 %v708
        %v979 = vpop.f32.mrb[0].mxu0
        %v980 = vadd.f32 0.0, %v979
        %v981 = vpop.f32.mrb[0].mxu0
        %v982 = vpop.f32.mrb[0].mxu0
        %v983 = vadd.f32 0.0, %v982
        %v984 = vpop.f32.mrb[0].mxu0
        %985 = vmatprep.mubr.bf16.mxu0 %v712
        %986 = vmatmul.mubr.bf16.gmra.mrb[0].mxu0 %v711
        %v987 = vpop.f32.mrb[0].mxu0
        %v988 = vadd.f32 0.0, %v987
        %v989 = vpop.f32.mrb[0].mxu0
        %v990 = vpop.f32.mrb[0].mxu0
        %v991 = vadd.f32 0.0, %v990
        %v992 = vpop.f32.mrb[0].mxu0
        %993 = vmatprep.mubr.bf16.mxu0 %v715
        %994 = vmatmul.mubr.bf16.gmra.mrb[0].mxu0 %v714
        %v995 = vpop.f32.mrb[0].mxu0
        %v996 = vadd.f32 0.0, %v995
        %v997 = vpop.f32.mrb[0].mxu0
        %v998 = vpop.f32.mrb[0].mxu0
        %v999 = vadd.f32 0.0, %v998
        %v1000 = vpop.f32.mrb[0].mxu0
        %1001 = vmatprep.mubr.bf16.mxu0 %v718
        %1002 = vmatmul.mubr.bf16.gmra.mrb[0].mxu0 %v717
        %v1003 = vpop.f32.mrb[0].mxu0
        %v1004 = vadd.f32 0.0, %v1003
        %v1005 = vpop.f32.mrb[0].mxu0
        %v1006 = vpop.f32.mrb[0].mxu0
        %v1007 = vadd.f32 0.0, %v1006
        %v1008 = vpop.f32.mrb[0].mxu0
        %1009 = vmatprep.mubr.bf16.mxu0 %v721
        %1010 = vmatmul.mubr.bf16.gmra.mrb[0].mxu0 %v720
        %v1011 = vpop.f32.mrb[0].mxu0
        %v1012 = vadd.f32 0.0, %v1011
        %v1013 = vpop.f32.mrb[0].mxu0
        %v1014 = vpop.f32.mrb[0].mxu0
        %v1015 = vadd.f32 0.0, %v1014
        %v1016 = vpop.f32.mrb[0].mxu0
        %1017 = vmatprep.mubr.bf16.mxu0 %v724
        %1018 = vmatmul.mubr.bf16.gmra.mrb[0].mxu0 %v723
        %v1019 = vpop.f32.mrb[0].mxu0
        %v1020 = vadd.f32 0.0, %v1019
        %v1021 = vpop.f32.mrb[0].mxu0
        %v1022 = vpop.f32.mrb[0].mxu0
        %v1023 = vadd.f32 0.0, %v1022
        %v1024 = vpop.f32.mrb[0].mxu0
        %1025 = vmatprep.mubr.bf16.mxu0 %v727
        %1026 = vmatmul.mubr.bf16.gmra.mrb[0].mxu0 %v726
        %v1027 = vpop.f32.mrb[0].mxu0
        %v1028 = vadd.f32 0.0, %v1027
        %v1029 = vpop.f32.mrb[0].mxu0
        %v1030 = vpop.f32.mrb[0].mxu0
        %v1031 = vadd.f32 0.0, %v1030
        %v1032 = vpop.f32.mrb[0].mxu0
        %1033 = vdwg.mxu0
        %1034 = vmatprep.subr.bf16.mxu0 0
        %1035 = vmatpush1.bf16.msra.mxu0 %v905
        %1036 = vmatprep.subr.bf16.mxu0 0
        %1037 = vmatpush1.bf16.msra.mxu0 %v906
        %1038 = vmatprep.subr.bf16.mxu0 0
        %1039 = vmatpush1.bf16.msra.mxu0 %v907
        %1040 = vmatprep.subr.bf16.mxu0 0
        %1041 = vmatpush1.bf16.msra.mxu0 %v908
        %1042 = vmatprep.subr.bf16.mxu0 0
        %1043 = vmatpush1.bf16.msra.mxu0 %v909
        %1044 = vmatprep.subr.bf16.mxu0 0
        %1045 = vmatpush1.bf16.msra.mxu0 %v910
        %1046 = vmatprep.subr.bf16.mxu0 0
        %1047 = vmatpush1.bf16.msra.mxu0 %v911
        %1048 = vmatprep.subr.bf16.mxu0 0
        %1049 = vmatpush1.bf16.msra.mxu0 %v912
        %1050 = vmatprep.subr.bf16.mxu0 0
        %1051 = vmatpush1.bf16.msra.mxu0 0
        %1052 = vmatprep.subr.bf16.mxu0 0
        %1053 = vmatpush1.bf16.msra.mxu0 0
        %1054 = vmatprep.subr.bf16.mxu0 0
        %1055 = vmatpush1.bf16.msra.mxu0 0
        %1056 = vmatprep.subr.bf16.mxu0 0
        %1057 = vmatpush1.bf16.msra.mxu0 0
        %1058 = vmatprep.subr.bf16.mxu0 0
        %1059 = vmatpush1.bf16.msra.mxu0 0
        %1060 = vmatprep.subr.bf16.mxu0 0
        %1061 = vmatpush1.bf16.msra.mxu0 0
        %1062 = vmatprep.subr.bf16.mxu0 0
        %1063 = vmatpush1.bf16.msra.mxu0 0
        %1064 = vmatprep.subr.bf16.mxu0 0
        %1065 = vmatpush1.bf16.msra.mxu0 0
        %1066 = vmatprep.mubr.bf16.mxu0 0
        %1067 = vmatmul.mubr.bf16.gmra.mrb[0].mxu0 %v707
        %v1068 = vpop.f32.mrb[0].mxu0
        %v1069 = vadd.f32 %v972, %v1068
        %v1070 = vpop.f32.mrb[0].mxu0
        %v1071 = vpop.f32.mrb[0].mxu0
        %v1072 = vadd.f32 %v975, %v1071
        %v1073 = vpop.f32.mrb[0].mxu0
        %1074 = vmatprep.mubr.bf16.mxu0 0
        %1075 = vmatmul.mubr.bf16.gmra.mrb[0].mxu0 %v710
        %v1076 = vpop.f32.mrb[0].mxu0
        %v1077 = vadd.f32 %v980, %v1076
        %v1078 = vpop.f32.mrb[0].mxu0
        %v1079 = vpop.f32.mrb[0].mxu0
        %v1080 = vadd.f32 %v983, %v1079
        %v1081 = vpop.f32.mrb[0].mxu0
        %1082 = vmatprep.mubr.bf16.mxu0 0
        %1083 = vmatmul.mubr.bf16.gmra.mrb[0].mxu0 %v713
        %v1084 = vpop.f32.mrb[0].mxu0
        %v1085 = vadd.f32 %v988, %v1084
        %v1086 = vpop.f32.mrb[0].mxu0
        %v1087 = vpop.f32.mrb[0].mxu0
        %v1088 = vadd.f32 %v991, %v1087
        %v1089 = vpop.f32.mrb[0].mxu0
        %1090 = vmatprep.mubr.bf16.mxu0 0
        %1091 = vmatmul.mubr.bf16.gmra.mrb[0].mxu0 %v716
        %v1092 = vpop.f32.mrb[0].mxu0
        %v1093 = vadd.f32 %v996, %v1092
        %v1094 = vpop.f32.mrb[0].mxu0
        %v1095 = vpop.f32.mrb[0].mxu0
        %v1096 = vadd.f32 %v999, %v1095
        %v1097 = vpop.f32.mrb[0].mxu0
        %1098 = vmatprep.mubr.bf16.mxu0 0
        %1099 = vmatmul.mubr.bf16.gmra.mrb[0].mxu0 %v719
        %v1100 = vpop.f32.mrb[0].mxu0
        %v1101 = vadd.f32 %v1004, %v1100
        %v1102 = vpop.f32.mrb[0].mxu0
        %v1103 = vpop.f32.mrb[0].mxu0
        %v1104 = vadd.f32 %v1007, %v1103
        %v1105 = vpop.f32.mrb[0].mxu0
        %1106 = vmatprep.mubr.bf16.mxu0 0
        %1107 = vmatmul.mubr.bf16.gmra.mrb[0].mxu0 %v722
        %v1108 = vpop.f32.mrb[0].mxu0
        %v1109 = vadd.f32 %v1012, %v1108
        %v1110 = vpop.f32.mrb[0].mxu0
        %v1111 = vpop.f32.mrb[0].mxu0
        %v1112 = vadd.f32 %v1015, %v1111
        %v1113 = vpop.f32.mrb[0].mxu0
        %1114 = vmatprep.mubr.bf16.mxu0 0
        %1115 = vmatmul.mubr.bf16.gmra.mrb[0].mxu0 %v725
        %v1116 = vpop.f32.mrb[0].mxu0
        %v1117 = vadd.f32 %v1020, %v1116
        %v1118 = vpop.f32.mrb[0].mxu0
        %v1119 = vpop.f32.mrb[0].mxu0
        %v1120 = vadd.f32 %v1023, %v1119
        %v1121 = vpop.f32.mrb[0].mxu0
        %1122 = vmatprep.mubr.bf16.mxu0 0
        %1123 = vmatmul.mubr.bf16.gmra.mrb[0].mxu0 %v728
        %v1124 = vpop.f32.mrb[0].mxu0
        %v1125 = vadd.f32 %v1028, %v1124
        %v1126 = vpop.f32.mrb[0].mxu0
        %v1127 = vpop.f32.mrb[0].mxu0
        %v1128 = vadd.f32 %v1031, %v1127
        %v1129 = vpop.f32.mrb[0].mxu0
        %1130 = vdwg.mxu0
        %v1131 = vadd.f32 %v729, %v1069
        %v1132 = vadd.f32 %v730, %v1072
        %v1133 = vadd.f32 %v731, %v1077
        %v1134 = vadd.f32 %v732, %v1080
        %v1135 = vadd.f32 %v733, %v1085
        %v1136 = vadd.f32 %v734, %v1088
        %v1137 = vadd.f32 %v735, %v1093
        %v1138 = vadd.f32 %v736, %v1096
        %v1139 = vadd.f32 %v737, %v1101
        %v1140 = vadd.f32 %v738, %v1104
        %v1141 = vadd.f32 %v739, %v1109
        %v1142 = vadd.f32 %v740, %v1112
        %v1143 = vadd.f32 %v741, %v1117
        %v1144 = vadd.f32 %v742, %v1120
        %v1145 = vadd.f32 %v743, %v1125
        %v1146 = vadd.f32 %v744, %v1128
        %1147 = vst [vmem:[#allocation3] sm:$0xff] %v1131
        %1148 = vst [vmem:[#allocation3 + $0x8] sm:$0xff] %v1132
        %1149 = vst [vmem:[#allocation3 + $0x10] sm:$0xff] %v1133
        %1150 = vst [vmem:[#allocation3 + $0x18] sm:$0xff] %v1134
        %1151 = vst [vmem:[#allocation3 + $0x20] sm:$0xff] %v1135
        %1152 = vst [vmem:[#allocation3 + $0x28] sm:$0xff] %v1136
        %1153 = vst [vmem:[#allocation3 + $0x30] sm:$0xff] %v1137
        %1154 = vst [vmem:[#allocation3 + $0x38] sm:$0xff] %v1138
        %1155 = vst [vmem:[#allocation3 + $0x40] sm:$0xff] %v1139
        %1156 = vst [vmem:[#allocation3 + $0x48] sm:$0xff] %v1140
        %1157 = vst [vmem:[#allocation3 + $0x50] sm:$0xff] %v1141
        %1158 = vst [vmem:[#allocation3 + $0x58] sm:$0xff] %v1142
        %1159 = vst [vmem:[#allocation3 + $0x60] sm:$0xff] %v1143
        %1160 = vst [vmem:[#allocation3 + $0x68] sm:$0xff] %v1144
        %1161 = vst [vmem:[#allocation3 + $0x70] sm:$0xff] %v1145
        %1162 = vst [vmem:[#allocation3 + $0x78] sm:$0xff] %v1146
        %v1163 = vld [vmem:[%s393] sm:$0xff]
        %v1164 = vld [vmem:[%s393 + $0x8] sm:$0xff]
        %v1165 = vld [vmem:[%s393 + $0x10] sm:$0xff]
        %v1166 = vld [vmem:[%s393 + $0x18] sm:$0xff]
        %v1167 = vld [vmem:[%s393 + $0x20] sm:$0xff]
        %v1168 = vld [vmem:[%s393 + $0x28] sm:$0xff]
        %v1169 = vld [vmem:[%s393 + $0x30] sm:$0xff]
        %v1170 = vld [vmem:[%s393 + $0x38] sm:$0xff]
        %v1171 = vld [vmem:[%s393 + $0x40] sm:$0xff]
        %v1172 = vld [vmem:[%s393 + $0x48] sm:$0xff]
        %v1173 = vld [vmem:[%s393 + $0x50] sm:$0xff]
        %v1174 = vld [vmem:[%s393 + $0x58] sm:$0xff]
        %v1175 = vld [vmem:[%s393 + $0x60] sm:$0xff]
        %v1176 = vld [vmem:[%s393 + $0x68] sm:$0xff]
        %v1177 = vld [vmem:[%s393 + $0x70] sm:$0xff]
        %v1178 = vld [vmem:[%s393 + $0x78] sm:$0xff]
        %v1179 = vld [vmem:[%s393 + $0x80] sm:$0xff]
        %v1180 = vld [vmem:[%s393 + $0x88] sm:$0xff]
        %v1181 = vld [vmem:[%s393 + $0x90] sm:$0xff]
        %v1182 = vld [vmem:[%s393 + $0x98] sm:$0xff]
        %v1183 = vld [vmem:[%s393 + $0xa0] sm:$0xff]
        %v1184 = vld [vmem:[%s393 + $0xa8] sm:$0xff]
        %v1185 = vld [vmem:[%s393 + $0xb0] sm:$0xff]
        %v1186 = vld [vmem:[%s393 + $0xb8] sm:$0xff]
        %v1187 = vld [vmem:[#allocation3] sm:$0xff]
        %v1188 = vld [vmem:[#allocation3 + $0x8] sm:$0xff]
        %v1189 = vld [vmem:[#allocation3 + $0x10] sm:$0xff]
        %v1190 = vld [vmem:[#allocation3 + $0x18] sm:$0xff]
        %v1191 = vld [vmem:[#allocation3 + $0x20] sm:$0xff]
        %v1192 = vld [vmem:[#allocation3 + $0x28] sm:$0xff]
        %v1193 = vld [vmem:[#allocation3 + $0x30] sm:$0xff]
        %v1194 = vld [vmem:[#allocation3 + $0x38] sm:$0xff]
        %v1195 = vld [vmem:[#allocation3 + $0x40] sm:$0xff]
        %v1196 = vld [vmem:[#allocation3 + $0x48] sm:$0xff]
        %v1197 = vld [vmem:[#allocation3 + $0x50] sm:$0xff]
        %v1198 = vld [vmem:[#allocation3 + $0x58] sm:$0xff]
        %v1199 = vld [vmem:[#allocation3 + $0x60] sm:$0xff]
        %v1200 = vld [vmem:[#allocation3 + $0x68] sm:$0xff]
        %v1201 = vld [vmem:[#allocation3 + $0x70] sm:$0xff]
        %v1202 = vld [vmem:[#allocation3 + $0x78] sm:$0xff]
        %s1203 = scalar_lea.vmem [#allocation10], 192
        %v1204 = vld [vmem:[%s1203] sm:$0xf]
        %v1205 = vld [vmem:[%s1203 + $0x4] sm:$0xf]
        %v1206 = vld [vmem:[%s1203 + $0x8] sm:$0xf]
        %v1207 = vld [vmem:[%s1203 + $0xc] sm:$0xf]
        %v1208 = vld [vmem:[%s1203 + $0x10] sm:$0xf]
        %v1209 = vld [vmem:[%s1203 + $0x14] sm:$0xf]
        %v1210 = vld [vmem:[%s1203 + $0x18] sm:$0xf]
        %v1211 = vld [vmem:[%s1203 + $0x1c] sm:$0xf]
        %v1212 = vld [vmem:[%s1203 + $0x20] sm:$0xf]
        %v1213 = vld [vmem:[%s1203 + $0x24] sm:$0xf]
        %v1214 = vld [vmem:[%s1203 + $0x28] sm:$0xf]
        %v1215 = vld [vmem:[%s1203 + $0x2c] sm:$0xf]
        %v1216 = vld [vmem:[%s1203 + $0x30] sm:$0xf]
        %v1217 = vld [vmem:[%s1203 + $0x34] sm:$0xf]
        %v1218 = vld [vmem:[%s1203 + $0x38] sm:$0xf]
        %v1219 = vld [vmem:[%s1203 + $0x3c] sm:$0xf]
        %v1220 = vld [vmem:[%s1203 + $0x40] sm:$0xf]
        %v1221 = vld [vmem:[%s1203 + $0x44] sm:$0xf]
        %v1222 = vld [vmem:[%s1203 + $0x48] sm:$0xf]
        %v1223 = vld [vmem:[%s1203 + $0x4c] sm:$0xf]
        %v1224 = vld [vmem:[%s1203 + $0x50] sm:$0xf]
        %v1225 = vld [vmem:[%s1203 + $0x54] sm:$0xf]
        %v1226 = vld [vmem:[%s1203 + $0x58] sm:$0xf]
        %v1227 = vld [vmem:[%s1203 + $0x5c] sm:$0xf]
        %v1228 = vld [vmem:[%s1203 + $0x60] sm:$0xf]
        %v1229 = vld [vmem:[%s1203 + $0x64] sm:$0xf]
        %v1230 = vld [vmem:[%s1203 + $0x68] sm:$0xf]
        %v1231 = vld [vmem:[%s1203 + $0x6c] sm:$0xf]
        %v1232 = vld [vmem:[%s1203 + $0x70] sm:$0xf]
        %v1233 = vld [vmem:[%s1203 + $0x74] sm:$0xf]
        %v1234 = vld [vmem:[%s1203 + $0x78] sm:$0xf]
        %v1235 = vld [vmem:[%s1203 + $0x7c] sm:$0xf]
        %v1236 = vld [vmem:[%s1203 + $0x80] sm:$0xf]
        %v1237 = vld [vmem:[%s1203 + $0x84] sm:$0xf]
        %v1238 = vld [vmem:[%s1203 + $0x88] sm:$0xf]
        %v1239 = vld [vmem:[%s1203 + $0x8c] sm:$0xf]
        %v1240 = vld [vmem:[%s1203 + $0x90] sm:$0xf]
        %v1241 = vld [vmem:[%s1203 + $0x94] sm:$0xf]
        %v1242 = vld [vmem:[%s1203 + $0x98] sm:$0xf]
        %v1243 = vld [vmem:[%s1203 + $0x9c] sm:$0xf]
        %v1244 = vld [vmem:[%s1203 + $0xa0] sm:$0xf]
        %v1245 = vld [vmem:[%s1203 + $0xa4] sm:$0xf]
        %v1246 = vld [vmem:[%s1203 + $0xa8] sm:$0xf]
        %v1247 = vld [vmem:[%s1203 + $0xac] sm:$0xf]
        %v1248 = vld [vmem:[%s1203 + $0xb0] sm:$0xf]
        %v1249 = vld [vmem:[%s1203 + $0xb4] sm:$0xf]
        %v1250 = vld [vmem:[%s1203 + $0xb8] sm:$0xf]
        %v1251 = vld [vmem:[%s1203 + $0xbc] sm:$0xf]
        %v1300 = vunpack.c.l.b16 %v1204
        %v1301 = vunpack.c.l.b16 %v1205
        %v1302 = vunpack.c.l.b16 %v1206
        %v1303 = vunpack.c.l.b16 %v1207
        %v1304 = vunpack.c.l.b16 %v1208
        %v1305 = vunpack.c.l.b16 %v1209
        %v1306 = vunpack.c.l.b16 %v1210
        %v1307 = vunpack.c.l.b16 %v1211
        %v1308 = vunpack.c.l.b16 %v1212
        %v1309 = vunpack.c.l.b16 %v1213
        %v1310 = vunpack.c.l.b16 %v1214
        %v1311 = vunpack.c.l.b16 %v1215
        %v1312 = vunpack.c.l.b16 %v1216
        %v1313 = vunpack.c.l.b16 %v1217
        %v1314 = vunpack.c.l.b16 %v1218
        %v1315 = vunpack.c.l.b16 %v1219
        %v1316 = vunpack.c.l.b16 %v1220
        %v1317 = vunpack.c.l.b16 %v1221
        %v1318 = vunpack.c.l.b16 %v1222
        %v1319 = vunpack.c.l.b16 %v1223
        %v1320 = vunpack.c.l.b16 %v1224
        %v1321 = vunpack.c.l.b16 %v1225
        %v1322 = vunpack.c.l.b16 %v1226
        %v1323 = vunpack.c.l.b16 %v1227
        %v1324 = vunpack.c.l.b16 %v1228
        %v1325 = vunpack.c.l.b16 %v1229
        %v1326 = vunpack.c.l.b16 %v1230
        %v1327 = vunpack.c.l.b16 %v1231
        %v1328 = vunpack.c.l.b16 %v1232
        %v1329 = vunpack.c.l.b16 %v1233
        %v1330 = vunpack.c.l.b16 %v1234
        %v1331 = vunpack.c.l.b16 %v1235
        %v1332 = vunpack.c.l.b16 %v1236
        %v1333 = vunpack.c.l.b16 %v1237
        %v1334 = vunpack.c.l.b16 %v1238
        %v1335 = vunpack.c.l.b16 %v1239
        %v1336 = vunpack.c.l.b16 %v1240
        %v1337 = vunpack.c.l.b16 %v1241
        %v1338 = vunpack.c.l.b16 %v1242
        %v1339 = vunpack.c.l.b16 %v1243
        %v1340 = vunpack.c.l.b16 %v1244
        %v1341 = vunpack.c.l.b16 %v1245
        %v1342 = vunpack.c.l.b16 %v1246
        %v1343 = vunpack.c.l.b16 %v1247
        %v1344 = vunpack.c.l.b16 %v1248
        %v1345 = vunpack.c.l.b16 %v1249
        %v1346 = vunpack.c.l.b16 %v1250
        %v1347 = vunpack.c.l.b16 %v1251
        %v1348 = vpack.c.b16 %v1301, %v1300
        %v1349 = vpack.c.b16 %v1303, %v1302
        %v1350 = vpack.c.b16 %v1305, %v1304
        %v1351 = vpack.c.b16 %v1307, %v1306
        %v1352 = vpack.c.b16 %v1309, %v1308
        %v1353 = vpack.c.b16 %v1311, %v1310
        %v1354 = vpack.c.b16 %v1313, %v1312
        %v1355 = vpack.c.b16 %v1315, %v1314
        %v1356 = vpack.c.b16 %v1317, %v1316
        %v1357 = vpack.c.b16 %v1319, %v1318
        %v1358 = vpack.c.b16 %v1321, %v1320
        %v1359 = vpack.c.b16 %v1323, %v1322
        %v1360 = vpack.c.b16 %v1325, %v1324
        %v1361 = vpack.c.b16 %v1327, %v1326
        %v1362 = vpack.c.b16 %v1329, %v1328
        %v1363 = vpack.c.b16 %v1331, %v1330
        %v1364 = vpack.c.b16 %v1333, %v1332
        %v1365 = vpack.c.b16 %v1335, %v1334
        %v1366 = vpack.c.b16 %v1337, %v1336
        %v1367 = vpack.c.b16 %v1339, %v1338
        %v1368 = vpack.c.b16 %v1341, %v1340
        %v1369 = vpack.c.b16 %v1343, %v1342
        %v1370 = vpack.c.b16 %v1345, %v1344
        %v1371 = vpack.c.b16 %v1347, %v1346
        %1396 = vmatprep.subr.bf16.mxu0 0
        %1397 = vmatpush1.bf16.msra.mxu0 %v1348
        %1398 = vmatprep.subr.bf16.mxu0 0
        %1399 = vmatpush1.bf16.msra.mxu0 %v1349
        %1400 = vmatprep.subr.bf16.mxu0 0
        %1401 = vmatpush1.bf16.msra.mxu0 %v1350
        %1402 = vmatprep.subr.bf16.mxu0 0
        %1403 = vmatpush1.bf16.msra.mxu0 %v1351
        %1404 = vmatprep.subr.bf16.mxu0 0
        %1405 = vmatpush1.bf16.msra.mxu0 %v1352
        %1406 = vmatprep.subr.bf16.mxu0 0
        %1407 = vmatpush1.bf16.msra.mxu0 %v1353
        %1408 = vmatprep.subr.bf16.mxu0 0
        %1409 = vmatpush1.bf16.msra.mxu0 %v1354
        %1410 = vmatprep.subr.bf16.mxu0 0
        %1411 = vmatpush1.bf16.msra.mxu0 %v1355
        %1412 = vmatprep.subr.bf16.mxu0 0
        %1413 = vmatpush1.bf16.msra.mxu0 %v1356
        %1414 = vmatprep.subr.bf16.mxu0 0
        %1415 = vmatpush1.bf16.msra.mxu0 %v1357
        %1416 = vmatprep.subr.bf16.mxu0 0
        %1417 = vmatpush1.bf16.msra.mxu0 %v1358
        %1418 = vmatprep.subr.bf16.mxu0 0
        %1419 = vmatpush1.bf16.msra.mxu0 %v1359
        %1420 = vmatprep.subr.bf16.mxu0 0
        %1421 = vmatpush1.bf16.msra.mxu0 %v1360
        %1422 = vmatprep.subr.bf16.mxu0 0
        %1423 = vmatpush1.bf16.msra.mxu0 %v1361
        %1424 = vmatprep.subr.bf16.mxu0 0
        %1425 = vmatpush1.bf16.msra.mxu0 %v1362
        %1426 = vmatprep.subr.bf16.mxu0 0
        %1427 = vmatpush1.bf16.msra.mxu0 %v1363
        %1428 = vmatprep.mubr.bf16.mxu0 %v1164
        %1429 = vmatmul.mubr.bf16.gmra.mrb[0].mxu0 %v1163
        %v1430 = vpop.f32.mrb[0].mxu0
        %v1431 = vadd.f32 0.0, %v1430
        %v1432 = vpop.f32.mrb[0].mxu0
        %v1433 = vpop.f32.mrb[0].mxu0
        %v1434 = vadd.f32 0.0, %v1433
        %v1435 = vpop.f32.mrb[0].mxu0
        %1436 = vmatprep.mubr.bf16.mxu0 %v1167
        %1437 = vmatmul.mubr.bf16.gmra.mrb[0].mxu0 %v1166
        %v1438 = vpop.f32.mrb[0].mxu0
        %v1439 = vadd.f32 0.0, %v1438
        %v1440 = vpop.f32.mrb[0].mxu0
        %v1441 = vpop.f32.mrb[0].mxu0
        %v1442 = vadd.f32 0.0, %v1441
        %v1443 = vpop.f32.mrb[0].mxu0
        %1444 = vmatprep.mubr.bf16.mxu0 %v1170
        %1445 = vmatmul.mubr.bf16.gmra.mrb[0].mxu0 %v1169
        %v1446 = vpop.f32.mrb[0].mxu0
        %v1447 = vadd.f32 0.0, %v1446
        %v1448 = vpop.f32.mrb[0].mxu0
        %v1449 = vpop.f32.mrb[0].mxu0
        %v1450 = vadd.f32 0.0, %v1449
        %v1451 = vpop.f32.mrb[0].mxu0
        %1452 = vmatprep.mubr.bf16.mxu0 %v1173
        %1453 = vmatmul.mubr.bf16.gmra.mrb[0].mxu0 %v1172
        %v1454 = vpop.f32.mrb[0].mxu0
        %v1455 = vadd.f32 0.0, %v1454
        %v1456 = vpop.f32.mrb[0].mxu0
        %v1457 = vpop.f32.mrb[0].mxu0
        %v1458 = vadd.f32 0.0, %v1457
        %v1459 = vpop.f32.mrb[0].mxu0
        %1460 = vmatprep.mubr.bf16.mxu0 %v1176
        %1461 = vmatmul.mubr.bf16.gmra.mrb[0].mxu0 %v1175
        %v1462 = vpop.f32.mrb[0].mxu0
        %v1463 = vadd.f32 0.0, %v1462
        %v1464 = vpop.f32.mrb[0].mxu0
        %v1465 = vpop.f32.mrb[0].mxu0
        %v1466 = vadd.f32 0.0, %v1465
        %v1467 = vpop.f32.mrb[0].mxu0
        %1468 = vmatprep.mubr.bf16.mxu0 %v1179
        %1469 = vmatmul.mubr.bf16.gmra.mrb[0].mxu0 %v1178
        %v1470 = vpop.f32.mrb[0].mxu0
        %v1471 = vadd.f32 0.0, %v1470
        %v1472 = vpop.f32.mrb[0].mxu0
        %v1473 = vpop.f32.mrb[0].mxu0
        %v1474 = vadd.f32 0.0, %v1473
        %v1475 = vpop.f32.mrb[0].mxu0
        %1476 = vmatprep.mubr.bf16.mxu0 %v1182
        %1477 = vmatmul.mubr.bf16.gmra.mrb[0].mxu0 %v1181
        %v1478 = vpop.f32.mrb[0].mxu0
        %v1479 = vadd.f32 0.0, %v1478
        %v1480 = vpop.f32.mrb[0].mxu0
        %v1481 = vpop.f32.mrb[0].mxu0
        %v1482 = vadd.f32 0.0, %v1481
        %v1483 = vpop.f32.mrb[0].mxu0
        %1484 = vmatprep.mubr.bf16.mxu0 %v1185
        %1485 = vmatmul.mubr.bf16.gmra.mrb[0].mxu0 %v1184
        %v1486 = vpop.f32.mrb[0].mxu0
        %v1487 = vadd.f32 0.0, %v1486
        %v1488 = vpop.f32.mrb[0].mxu0
        %v1489 = vpop.f32.mrb[0].mxu0
        %v1490 = vadd.f32 0.0, %v1489
        %v1491 = vpop.f32.mrb[0].mxu0
        %1492 = vdwg.mxu0
        %1493 = vmatprep.subr.bf16.mxu0 0
        %1494 = vmatpush1.bf16.msra.mxu0 %v1364
        %1495 = vmatprep.subr.bf16.mxu0 0
        %1496 = vmatpush1.bf16.msra.mxu0 %v1365
        %1497 = vmatprep.subr.bf16.mxu0 0
        %1498 = vmatpush1.bf16.msra.mxu0 %v1366
        %1499 = vmatprep.subr.bf16.mxu0 0
        %1500 = vmatpush1.bf16.msra.mxu0 %v1367
        %1501 = vmatprep.subr.bf16.mxu0 0
        %1502 = vmatpush1.bf16.msra.mxu0 %v1368
        %1503 = vmatprep.subr.bf16.mxu0 0
        %1504 = vmatpush1.bf16.msra.mxu0 %v1369
        %1505 = vmatprep.subr.bf16.mxu0 0
        %1506 = vmatpush1.bf16.msra.mxu0 %v1370
        %1507 = vmatprep.subr.bf16.mxu0 0
        %1508 = vmatpush1.bf16.msra.mxu0 %v1371
        %1509 = vmatprep.subr.bf16.mxu0 0
        %1510 = vmatpush1.bf16.msra.mxu0 0
        %1511 = vmatprep.subr.bf16.mxu0 0
        %1512 = vmatpush1.bf16.msra.mxu0 0
        %1513 = vmatprep.subr.bf16.mxu0 0
        %1514 = vmatpush1.bf16.msra.mxu0 0
        %1515 = vmatprep.subr.bf16.mxu0 0
        %1516 = vmatpush1.bf16.msra.mxu0 0
        %1517 = vmatprep.subr.bf16.mxu0 0
        %1518 = vmatpush1.bf16.msra.mxu0 0
        %1519 = vmatprep.subr.bf16.mxu0 0
        %1520 = vmatpush1.bf16.msra.mxu0 0
        %1521 = vmatprep.subr.bf16.mxu0 0
        %1522 = vmatpush1.bf16.msra.mxu0 0
        %1523 = vmatprep.subr.bf16.mxu0 0
        %1524 = vmatpush1.bf16.msra.mxu0 0
        %1525 = vmatprep.mubr.bf16.mxu0 0
        %1526 = vmatmul.mubr.bf16.gmra.mrb[0].mxu0 %v1165
        %v1527 = vpop.f32.mrb[0].mxu0
        %v1528 = vadd.f32 %v1431, %v1527
        %v1529 = vpop.f32.mrb[0].mxu0
        %v1530 = vpop.f32.mrb[0].mxu0
        %v1531 = vadd.f32 %v1434, %v1530
        %v1532 = vpop.f32.mrb[0].mxu0
        %1533 = vmatprep.mubr.bf16.mxu0 0
        %1534 = vmatmul.mubr.bf16.gmra.mrb[0].mxu0 %v1168
        %v1535 = vpop.f32.mrb[0].mxu0
        %v1536 = vadd.f32 %v1439, %v1535
        %v1537 = vpop.f32.mrb[0].mxu0
        %v1538 = vpop.f32.mrb[0].mxu0
        %v1539 = vadd.f32 %v1442, %v1538
        %v1540 = vpop.f32.mrb[0].mxu0
        %1541 = vmatprep.mubr.bf16.mxu0 0
        %1542 = vmatmul.mubr.bf16.gmra.mrb[0].mxu0 %v1171
        %v1543 = vpop.f32.mrb[0].mxu0
        %v1544 = vadd.f32 %v1447, %v1543
        %v1545 = vpop.f32.mrb[0].mxu0
        %v1546 = vpop.f32.mrb[0].mxu0
        %v1547 = vadd.f32 %v1450, %v1546
        %v1548 = vpop.f32.mrb[0].mxu0
        %1549 = vmatprep.mubr.bf16.mxu0 0
        %1550 = vmatmul.mubr.bf16.gmra.mrb[0].mxu0 %v1174
        %v1551 = vpop.f32.mrb[0].mxu0
        %v1552 = vadd.f32 %v1455, %v1551
        %v1553 = vpop.f32.mrb[0].mxu0
        %v1554 = vpop.f32.mrb[0].mxu0
        %v1555 = vadd.f32 %v1458, %v1554
        %v1556 = vpop.f32.mrb[0].mxu0
        %1557 = vmatprep.mubr.bf16.mxu0 0
        %1558 = vmatmul.mubr.bf16.gmra.mrb[0].mxu0 %v1177
        %v1559 = vpop.f32.mrb[0].mxu0
        %v1560 = vadd.f32 %v1463, %v1559
        %v1561 = vpop.f32.mrb[0].mxu0
        %v1562 = vpop.f32.mrb[0].mxu0
        %v1563 = vadd.f32 %v1466, %v1562
        %v1564 = vpop.f32.mrb[0].mxu0
        %1565 = vmatprep.mubr.bf16.mxu0 0
        %1566 = vmatmul.mubr.bf16.gmra.mrb[0].mxu0 %v1180
        %v1567 = vpop.f32.mrb[0].mxu0
        %v1568 = vadd.f32 %v1471, %v1567
        %v1569 = vpop.f32.mrb[0].mxu0
        %v1570 = vpop.f32.mrb[0].mxu0
        %v1571 = vadd.f32 %v1474, %v1570
        %v1572 = vpop.f32.mrb[0].mxu0
        %1573 = vmatprep.mubr.bf16.mxu0 0
        %1574 = vmatmul.mubr.bf16.gmra.mrb[0].mxu0 %v1183
        %v1575 = vpop.f32.mrb[0].mxu0
        %v1576 = vadd.f32 %v1479, %v1575
        %v1577 = vpop.f32.mrb[0].mxu0
        %v1578 = vpop.f32.mrb[0].mxu0
        %v1579 = vadd.f32 %v1482, %v1578
        %v1580 = vpop.f32.mrb[0].mxu0
        %1581 = vmatprep.mubr.bf16.mxu0 0
        %1582 = vmatmul.mubr.bf16.gmra.mrb[0].mxu0 %v1186
        %v1583 = vpop.f32.mrb[0].mxu0
        %v1584 = vadd.f32 %v1487, %v1583
        %v1585 = vpop.f32.mrb[0].mxu0
        %v1586 = vpop.f32.mrb[0].mxu0
        %v1587 = vadd.f32 %v1490, %v1586
        %v1588 = vpop.f32.mrb[0].mxu0
        %1589 = vdwg.mxu0
        %v1590 = vadd.f32 %v1187, %v1528
        %v1591 = vadd.f32 %v1188, %v1531
        %v1592 = vadd.f32 %v1189, %v1536
        %v1593 = vadd.f32 %v1190, %v1539
        %v1594 = vadd.f32 %v1191, %v1544
        %v1595 = vadd.f32 %v1192, %v1547
        %v1596 = vadd.f32 %v1193, %v1552
        %v1597 = vadd.f32 %v1194, %v1555
        %v1598 = vadd.f32 %v1195, %v1560
        %v1599 = vadd.f32 %v1196, %v1563
        %v1600 = vadd.f32 %v1197, %v1568
        %v1601 = vadd.f32 %v1198, %v1571
        %v1602 = vadd.f32 %v1199, %v1576
        %v1603 = vadd.f32 %v1200, %v1579
        %v1604 = vadd.f32 %v1201, %v1584
        %v1605 = vadd.f32 %v1202, %v1587
        %1606 = vst [vmem:[#allocation3] sm:$0xff] %v1590
        %1607 = vst [vmem:[#allocation3 + $0x8] sm:$0xff] %v1591
        %1608 = vst [vmem:[#allocation3 + $0x10] sm:$0xff] %v1592
        %1609 = vst [vmem:[#allocation3 + $0x18] sm:$0xff] %v1593
        %1610 = vst [vmem:[#allocation3 + $0x20] sm:$0xff] %v1594
        %1611 = vst [vmem:[#allocation3 + $0x28] sm:$0xff] %v1595
        %1612 = vst [vmem:[#allocation3 + $0x30] sm:$0xff] %v1596
        %1613 = vst [vmem:[#allocation3 + $0x38] sm:$0xff] %v1597
        %1614 = vst [vmem:[#allocation3 + $0x40] sm:$0xff] %v1598
        %1615 = vst [vmem:[#allocation3 + $0x48] sm:$0xff] %v1599
        %1616 = vst [vmem:[#allocation3 + $0x50] sm:$0xff] %v1600
        %1617 = vst [vmem:[#allocation3 + $0x58] sm:$0xff] %v1601
        %1618 = vst [vmem:[#allocation3 + $0x60] sm:$0xff] %v1602
        %1619 = vst [vmem:[#allocation3 + $0x68] sm:$0xff] %v1603
        %1620 = vst [vmem:[#allocation3 + $0x70] sm:$0xff] %v1604
        %1621 = vst [vmem:[#allocation3 + $0x78] sm:$0xff] %v1605
        %s1622 = scalar_lea.vmem [#allocation2], 48
        %v1623 = vld [vmem:[%s1622] sm:$0xff]
        %v1624 = vld [vmem:[%s1622 + $0x8] sm:$0xff]
        %v1625 = vld [vmem:[%s1622 + $0x10] sm:$0xff]
        %v1626 = vld [vmem:[%s1622 + $0x18] sm:$0xff]
        %v1627 = vld [vmem:[%s1622 + $0x20] sm:$0xff]
        %v1628 = vld [vmem:[%s1622 + $0x28] sm:$0xff]
        %v1629 = vld [vmem:[%s1622 + $0x30] sm:$0xff]
        %v1630 = vld [vmem:[%s1622 + $0x38] sm:$0xff]
        %v1631 = vld [vmem:[%s1622 + $0x40] sm:$0xff]
        %v1632 = vld [vmem:[%s1622 + $0x48] sm:$0xff]
        %v1633 = vld [vmem:[%s1622 + $0x50] sm:$0xff]
        %v1634 = vld [vmem:[%s1622 + $0x58] sm:$0xff]
        %v1635 = vld [vmem:[%s1622 + $0x60] sm:$0xff]
        %v1636 = vld [vmem:[%s1622 + $0x68] sm:$0xff]
        %v1637 = vld [vmem:[%s1622 + $0x70] sm:$0xff]
        %v1638 = vld [vmem:[%s1622 + $0x78] sm:$0xff]
        %v1639 = vld [vmem:[%s1622 + $0x80] sm:$0xff]
        %v1640 = vld [vmem:[%s1622 + $0x88] sm:$0xff]
        %v1641 = vld [vmem:[%s1622 + $0x90] sm:$0xff]
        %v1642 = vld [vmem:[%s1622 + $0x98] sm:$0xff]
        %v1643 = vld [vmem:[%s1622 + $0xa0] sm:$0xff]
        %v1644 = vld [vmem:[%s1622 + $0xa8] sm:$0xff]
        %v1645 = vld [vmem:[%s1622 + $0xb0] sm:$0xff]
        %v1646 = vld [vmem:[%s1622 + $0xb8] sm:$0xff]
        %v1647 = vld [vmem:[#allocation3] sm:$0xff]
        %v1648 = vld [vmem:[#allocation3 + $0x8] sm:$0xff]
        %v1649 = vld [vmem:[#allocation3 + $0x10] sm:$0xff]
        %v1650 = vld [vmem:[#allocation3 + $0x18] sm:$0xff]
        %v1651 = vld [vmem:[#allocation3 + $0x20] sm:$0xff]
        %v1652 = vld [vmem:[#allocation3 + $0x28] sm:$0xff]
        %v1653 = vld [vmem:[#allocation3 + $0x30] sm:$0xff]
        %v1654 = vld [vmem:[#allocation3 + $0x38] sm:$0xff]
        %v1655 = vld [vmem:[#allocation3 + $0x40] sm:$0xff]
        %v1656 = vld [vmem:[#allocation3 + $0x48] sm:$0xff]
        %v1657 = vld [vmem:[#allocation3 + $0x50] sm:$0xff]
        %v1658 = vld [vmem:[#allocation3 + $0x58] sm:$0xff]
        %v1659 = vld [vmem:[#allocation3 + $0x60] sm:$0xff]
        %v1660 = vld [vmem:[#allocation3 + $0x68] sm:$0xff]
        %v1661 = vld [vmem:[#allocation3 + $0x70] sm:$0xff]
        %v1662 = vld [vmem:[#allocation3 + $0x78] sm:$0xff]
        %s1663 = scalar_lea.vmem [#allocation10], 384
        %v1664 = vld [vmem:[%s1663] sm:$0xf]
        %v1665 = vld [vmem:[%s1663 + $0x4] sm:$0xf]
        %v1666 = vld [vmem:[%s1663 + $0x8] sm:$0xf]
        %v1667 = vld [vmem:[%s1663 + $0xc] sm:$0xf]
        %v1668 = vld [vmem:[%s1663 + $0x10] sm:$0xf]
        %v1669 = vld [vmem:[%s1663 + $0x14] sm:$0xf]
        %v1670 = vld [vmem:[%s1663 + $0x18] sm:$0xf]
        %v1671 = vld [vmem:[%s1663 + $0x1c] sm:$0xf]
        %v1672 = vld [vmem:[%s1663 + $0x20] sm:$0xf]
        %v1673 = vld [vmem:[%s1663 + $0x24] sm:$0xf]
        %v1674 = vld [vmem:[%s1663 + $0x28] sm:$0xf]
        %v1675 = vld [vmem:[%s1663 + $0x2c] sm:$0xf]
        %v1676 = vld [vmem:[%s1663 + $0x30] sm:$0xf]
        %v1677 = vld [vmem:[%s1663 + $0x34] sm:$0xf]
        %v1678 = vld [vmem:[%s1663 + $0x38] sm:$0xf]
        %v1679 = vld [vmem:[%s1663 + $0x3c] sm:$0xf]
        %v1680 = vld [vmem:[%s1663 + $0x40] sm:$0xf]
        %v1681 = vld [vmem:[%s1663 + $0x44] sm:$0xf]
        %v1682 = vld [vmem:[%s1663 + $0x48] sm:$0xf]
        %v1683 = vld [vmem:[%s1663 + $0x4c] sm:$0xf]
        %v1684 = vld [vmem:[%s1663 + $0x50] sm:$0xf]
        %v1685 = vld [vmem:[%s1663 + $0x54] sm:$0xf]
        %v1686 = vld [vmem:[%s1663 + $0x58] sm:$0xf]
        %v1687 = vld [vmem:[%s1663 + $0x5c] sm:$0xf]
        %v1688 = vld [vmem:[%s1663 + $0x60] sm:$0xf]
        %v1689 = vld [vmem:[%s1663 + $0x64] sm:$0xf]
        %v1690 = vld [vmem:[%s1663 + $0x68] sm:$0xf]
        %v1691 = vld [vmem:[%s1663 + $0x6c] sm:$0xf]
        %v1692 = vld [vmem:[%s1663 + $0x70] sm:$0xf]
        %v1693 = vld [vmem:[%s1663 + $0x74] sm:$0xf]
        %v1694 = vld [vmem:[%s1663 + $0x78] sm:$0xf]
        %v1695 = vld [vmem:[%s1663 + $0x7c] sm:$0xf]
        %v1696 = vld [vmem:[%s1663 + $0x80] sm:$0xf]
        %v1697 = vld [vmem:[%s1663 + $0x84] sm:$0xf]
        %v1698 = vld [vmem:[%s1663 + $0x88] sm:$0xf]
        %v1699 = vld [vmem:[%s1663 + $0x8c] sm:$0xf]
        %v1700 = vld [vmem:[%s1663 + $0x90] sm:$0xf]
        %v1701 = vld [vmem:[%s1663 + $0x94] sm:$0xf]
        %v1702 = vld [vmem:[%s1663 + $0x98] sm:$0xf]
        %v1703 = vld [vmem:[%s1663 + $0x9c] sm:$0xf]
        %v1704 = vld [vmem:[%s1663 + $0xa0] sm:$0xf]
        %v1705 = vld [vmem:[%s1663 + $0xa4] sm:$0xf]
        %v1706 = vld [vmem:[%s1663 + $0xa8] sm:$0xf]
        %v1707 = vld [vmem:[%s1663 + $0xac] sm:$0xf]
        %v1708 = vld [vmem:[%s1663 + $0xb0] sm:$0xf]
        %v1709 = vld [vmem:[%s1663 + $0xb4] sm:$0xf]
        %v1710 = vld [vmem:[%s1663 + $0xb8] sm:$0xf]
        %v1711 = vld [vmem:[%s1663 + $0xbc] sm:$0xf]
        %v1760 = vunpack.c.l.b16 %v1664
        %v1761 = vunpack.c.l.b16 %v1665
        %v1762 = vunpack.c.l.b16 %v1666
        %v1763 = vunpack.c.l.b16 %v1667
        %v1764 = vunpack.c.l.b16 %v1668
        %v1765 = vunpack.c.l.b16 %v1669
        %v1766 = vunpack.c.l.b16 %v1670
        %v1767 = vunpack.c.l.b16 %v1671
        %v1768 = vunpack.c.l.b16 %v1672
        %v1769 = vunpack.c.l.b16 %v1673
        %v1770 = vunpack.c.l.b16 %v1674
        %v1771 = vunpack.c.l.b16 %v1675
        %v1772 = vunpack.c.l.b16 %v1676
        %v1773 = vunpack.c.l.b16 %v1677
        %v1774 = vunpack.c.l.b16 %v1678
        %v1775 = vunpack.c.l.b16 %v1679
        %v1776 = vunpack.c.l.b16 %v1680
        %v1777 = vunpack.c.l.b16 %v1681
        %v1778 = vunpack.c.l.b16 %v1682
        %v1779 = vunpack.c.l.b16 %v1683
        %v1780 = vunpack.c.l.b16 %v1684
        %v1781 = vunpack.c.l.b16 %v1685
        %v1782 = vunpack.c.l.b16 %v1686
        %v1783 = vunpack.c.l.b16 %v1687
        %v1784 = vunpack.c.l.b16 %v1688
        %v1785 = vunpack.c.l.b16 %v1689
        %v1786 = vunpack.c.l.b16 %v1690
        %v1787 = vunpack.c.l.b16 %v1691
        %v1788 = vunpack.c.l.b16 %v1692
        %v1789 = vunpack.c.l.b16 %v1693
        %v1790 = vunpack.c.l.b16 %v1694
        %v1791 = vunpack.c.l.b16 %v1695
        %v1792 = vunpack.c.l.b16 %v1696
        %v1793 = vunpack.c.l.b16 %v1697
        %v1794 = vunpack.c.l.b16 %v1698
        %v1795 = vunpack.c.l.b16 %v1699
        %v1796 = vunpack.c.l.b16 %v1700
        %v1797 = vunpack.c.l.b16 %v1701
        %v1798 = vunpack.c.l.b16 %v1702
        %v1799 = vunpack.c.l.b16 %v1703
        %v1800 = vunpack.c.l.b16 %v1704
        %v1801 = vunpack.c.l.b16 %v1705
        %v1802 = vunpack.c.l.b16 %v1706
        %v1803 = vunpack.c.l.b16 %v1707
        %v1804 = vunpack.c.l.b16 %v1708
        %v1805 = vunpack.c.l.b16 %v1709
        %v1806 = vunpack.c.l.b16 %v1710
        %v1807 = vunpack.c.l.b16 %v1711
        %v1808 = vpack.c.b16 %v1761, %v1760
        %v1809 = vpack.c.b16 %v1763, %v1762
        %v1810 = vpack.c.b16 %v1765, %v1764
        %v1811 = vpack.c.b16 %v1767, %v1766
        %v1812 = vpack.c.b16 %v1769, %v1768
        %v1813 = vpack.c.b16 %v1771, %v1770
        %v1814 = vpack.c.b16 %v1773, %v1772
        %v1815 = vpack.c.b16 %v1775, %v1774
        %v1816 = vpack.c.b16 %v1777, %v1776
        %v1817 = vpack.c.b16 %v1779, %v1778
        %v1818 = vpack.c.b16 %v1781, %v1780
        %v1819 = vpack.c.b16 %v1783, %v1782
        %v1820 = vpack.c.b16 %v1785, %v1784
        %v1821 = vpack.c.b16 %v1787, %v1786
        %v1822 = vpack.c.b16 %v1789, %v1788
        %v1823 = vpack.c.b16 %v1791, %v1790
        %v1824 = vpack.c.b16 %v1793, %v1792
        %v1825 = vpack.c.b16 %v1795, %v1794
        %v1826 = vpack.c.b16 %v1797, %v1796
        %v1827 = vpack.c.b16 %v1799, %v1798
        %v1828 = vpack.c.b16 %v1801, %v1800
        %v1829 = vpack.c.b16 %v1803, %v1802
        %v1830 = vpack.c.b16 %v1805, %v1804
        %v1831 = vpack.c.b16 %v1807, %v1806
        %1856 = vmatprep.subr.bf16.mxu0 0
        %1857 = vmatpush1.bf16.msra.mxu0 %v1808
        %1858 = vmatprep.subr.bf16.mxu0 0
        %1859 = vmatpush1.bf16.msra.mxu0 %v1809
        %1860 = vmatprep.subr.bf16.mxu0 0
        %1861 = vmatpush1.bf16.msra.mxu0 %v1810
        %1862 = vmatprep.subr.bf16.mxu0 0
        %1863 = vmatpush1.bf16.msra.mxu0 %v1811
        %1864 = vmatprep.subr.bf16.mxu0 0
        %1865 = vmatpush1.bf16.msra.mxu0 %v1812
        %1866 = vmatprep.subr.bf16.mxu0 0
        %1867 = vmatpush1.bf16.msra.mxu0 %v1813
        %1868 = vmatprep.subr.bf16.mxu0 0
        %1869 = vmatpush1.bf16.msra.mxu0 %v1814
        %1870 = vmatprep.subr.bf16.mxu0 0
        %1871 = vmatpush1.bf16.msra.mxu0 %v1815
        %1872 = vmatprep.subr.bf16.mxu0 0
        %1873 = vmatpush1.bf16.msra.mxu0 %v1816
        %1874 = vmatprep.subr.bf16.mxu0 0
        %1875 = vmatpush1.bf16.msra.mxu0 %v1817
        %1876 = vmatprep.subr.bf16.mxu0 0
        %1877 = vmatpush1.bf16.msra.mxu0 %v1818
        %1878 = vmatprep.subr.bf16.mxu0 0
        %1879 = vmatpush1.bf16.msra.mxu0 %v1819
        %1880 = vmatprep.subr.bf16.mxu0 0
        %1881 = vmatpush1.bf16.msra.mxu0 %v1820
        %1882 = vmatprep.subr.bf16.mxu0 0
        %1883 = vmatpush1.bf16.msra.mxu0 %v1821
        %1884 = vmatprep.subr.bf16.mxu0 0
        %1885 = vmatpush1.bf16.msra.mxu0 %v1822
        %1886 = vmatprep.subr.bf16.mxu0 0
        %1887 = vmatpush1.bf16.msra.mxu0 %v1823
        %1888 = vmatprep.mubr.bf16.mxu0 %v1624
        %1889 = vmatmul.mubr.bf16.gmra.mrb[0].mxu0 %v1623
        %v1890 = vpop.f32.mrb[0].mxu0
        %v1891 = vadd.f32 0.0, %v1890
        %v1892 = vpop.f32.mrb[0].mxu0
        %v1893 = vpop.f32.mrb[0].mxu0
        %v1894 = vadd.f32 0.0, %v1893
        %v1895 = vpop.f32.mrb[0].mxu0
        %1896 = vmatprep.mubr.bf16.mxu0 %v1627
        %1897 = vmatmul.mubr.bf16.gmra.mrb[0].mxu0 %v1626
        %v1898 = vpop.f32.mrb[0].mxu0
        %v1899 = vadd.f32 0.0, %v1898
        %v1900 = vpop.f32.mrb[0].mxu0
        %v1901 = vpop.f32.mrb[0].mxu0
        %v1902 = vadd.f32 0.0, %v1901
        %v1903 = vpop.f32.mrb[0].mxu0
        %1904 = vmatprep.mubr.bf16.mxu0 %v1630
        %1905 = vmatmul.mubr.bf16.gmra.mrb[0].mxu0 %v1629
        %v1906 = vpop.f32.mrb[0].mxu0
        %v1907 = vadd.f32 0.0, %v1906
        %v1908 = vpop.f32.mrb[0].mxu0
        %v1909 = vpop.f32.mrb[0].mxu0
        %v1910 = vadd.f32 0.0, %v1909
        %v1911 = vpop.f32.mrb[0].mxu0
        %1912 = vmatprep.mubr.bf16.mxu0 %v1633
        %1913 = vmatmul.mubr.bf16.gmra.mrb[0].mxu0 %v1632
        %v1914 = vpop.f32.mrb[0].mxu0
        %v1915 = vadd.f32 0.0, %v1914
        %v1916 = vpop.f32.mrb[0].mxu0
        %v1917 = vpop.f32.mrb[0].mxu0
        %v1918 = vadd.f32 0.0, %v1917
        %v1919 = vpop.f32.mrb[0].mxu0
        %1920 = vmatprep.mubr.bf16.mxu0 %v1636
        %1921 = vmatmul.mubr.bf16.gmra.mrb[0].mxu0 %v1635
        %v1922 = vpop.f32.mrb[0].mxu0
        %v1923 = vadd.f32 0.0, %v1922
        %v1924 = vpop.f32.mrb[0].mxu0
        %v1925 = vpop.f32.mrb[0].mxu0
        %v1926 = vadd.f32 0.0, %v1925
        %v1927 = vpop.f32.mrb[0].mxu0
        %1928 = vmatprep.mubr.bf16.mxu0 %v1639
        %1929 = vmatmul.mubr.bf16.gmra.mrb[0].mxu0 %v1638
        %v1930 = vpop.f32.mrb[0].mxu0
        %v1931 = vadd.f32 0.0, %v1930
        %v1932 = vpop.f32.mrb[0].mxu0
        %v1933 = vpop.f32.mrb[0].mxu0
        %v1934 = vadd.f32 0.0, %v1933
        %v1935 = vpop.f32.mrb[0].mxu0
        %1936 = vmatprep.mubr.bf16.mxu0 %v1642
        %1937 = vmatmul.mubr.bf16.gmra.mrb[0].mxu0 %v1641
        %v1938 = vpop.f32.mrb[0].mxu0
        %v1939 = vadd.f32 0.0, %v1938
        %v1940 = vpop.f32.mrb[0].mxu0
        %v1941 = vpop.f32.mrb[0].mxu0
        %v1942 = vadd.f32 0.0, %v1941
        %v1943 = vpop.f32.mrb[0].mxu0
        %1944 = vmatprep.mubr.bf16.mxu0 %v1645
        %1945 = vmatmul.mubr.bf16.gmra.mrb[0].mxu0 %v1644
        %v1946 = vpop.f32.mrb[0].mxu0
        %v1947 = vadd.f32 0.0, %v1946
        %v1948 = vpop.f32.mrb[0].mxu0
        %v1949 = vpop.f32.mrb[0].mxu0
        %v1950 = vadd.f32 0.0, %v1949
        %v1951 = vpop.f32.mrb[0].mxu0
        %1952 = vdwg.mxu0
        %1953 = vmatprep.subr.bf16.mxu0 0
        %1954 = vmatpush1.bf16.msra.mxu0 %v1824
        %1955 = vmatprep.subr.bf16.mxu0 0
        %1956 = vmatpush1.bf16.msra.mxu0 %v1825
        %1957 = vmatprep.subr.bf16.mxu0 0
        %1958 = vmatpush1.bf16.msra.mxu0 %v1826
        %1959 = vmatprep.subr.bf16.mxu0 0
        %1960 = vmatpush1.bf16.msra.mxu0 %v1827
        %1961 = vmatprep.subr.bf16.mxu0 0
        %1962 = vmatpush1.bf16.msra.mxu0 %v1828
        %1963 = vmatprep.subr.bf16.mxu0 0
        %1964 = vmatpush1.bf16.msra.mxu0 %v1829
        %1965 = vmatprep.subr.bf16.mxu0 0
        %1966 = vmatpush1.bf16.msra.mxu0 %v1830
        %1967 = vmatprep.subr.bf16.mxu0 0
        %1968 = vmatpush1.bf16.msra.mxu0 %v1831
        %1969 = vmatprep.subr.bf16.mxu0 0
        %1970 = vmatpush1.bf16.msra.mxu0 0
        %1971 = vmatprep.subr.bf16.mxu0 0
        %1972 = vmatpush1.bf16.msra.mxu0 0
        %1973 = vmatprep.subr.bf16.mxu0 0
        %1974 = vmatpush1.bf16.msra.mxu0 0
        %1975 = vmatprep.subr.bf16.mxu0 0
        %1976 = vmatpush1.bf16.msra.mxu0 0
        %1977 = vmatprep.subr.bf16.mxu0 0
        %1978 = vmatpush1.bf16.msra.mxu0 0
        %1979 = vmatprep.subr.bf16.mxu0 0
        %1980 = vmatpush1.bf16.msra.mxu0 0
        %1981 = vmatprep.subr.bf16.mxu0 0
        %1982 = vmatpush1.bf16.msra.mxu0 0
        %1983 = vmatprep.subr.bf16.mxu0 0
        %1984 = vmatpush1.bf16.msra.mxu0 0
        %1985 = vmatprep.mubr.bf16.mxu0 0
        %1986 = vmatmul.mubr.bf16.gmra.mrb[0].mxu0 %v1625
        %v1987 = vpop.f32.mrb[0].mxu0
        %v1988 = vadd.f32 %v1891, %v1987
        %v1989 = vpop.f32.mrb[0].mxu0
        %v1990 = vpop.f32.mrb[0].mxu0
        %v1991 = vadd.f32 %v1894, %v1990
        %v1992 = vpop.f32.mrb[0].mxu0
        %1993 = vmatprep.mubr.bf16.mxu0 0
        %1994 = vmatmul.mubr.bf16.gmra.mrb[0].mxu0 %v1628
        %v1995 = vpop.f32.mrb[0].mxu0
        %v1996 = vadd.f32 %v1899, %v1995
        %v1997 = vpop.f32.mrb[0].mxu0
        %v1998 = vpop.f32.mrb[0].mxu0
        %v1999 = vadd.f32 %v1902, %v1998
        %v2000 = vpop.f32.mrb[0].mxu0
        %2001 = vmatprep.mubr.bf16.mxu0 0
        %2002 = vmatmul.mubr.bf16.gmra.mrb[0].mxu0 %v1631
        %v2003 = vpop.f32.mrb[0].mxu0
        %v2004 = vadd.f32 %v1907, %v2003
        %v2005 = vpop.f32.mrb[0].mxu0
        %v2006 = vpop.f32.mrb[0].mxu0
        %v2007 = vadd.f32 %v1910, %v2006
        %v2008 = vpop.f32.mrb[0].mxu0
        %2009 = vmatprep.mubr.bf16.mxu0 0
        %2010 = vmatmul.mubr.bf16.gmra.mrb[0].mxu0 %v1634
        %v2011 = vpop.f32.mrb[0].mxu0
        %v2012 = vadd.f32 %v1915, %v2011
        %v2013 = vpop.f32.mrb[0].mxu0
        %v2014 = vpop.f32.mrb[0].mxu0
        %v2015 = vadd.f32 %v1918, %v2014
        %v2016 = vpop.f32.mrb[0].mxu0
        %2017 = vmatprep.mubr.bf16.mxu0 0
        %2018 = vmatmul.mubr.bf16.gmra.mrb[0].mxu0 %v1637
        %v2019 = vpop.f32.mrb[0].mxu0
        %v2020 = vadd.f32 %v1923, %v2019
        %v2021 = vpop.f32.mrb[0].mxu0
        %v2022 = vpop.f32.mrb[0].mxu0
        %v2023 = vadd.f32 %v1926, %v2022
        %v2024 = vpop.f32.mrb[0].mxu0
        %2025 = vmatprep.mubr.bf16.mxu0 0
        %2026 = vmatmul.mubr.bf16.gmra.mrb[0].mxu0 %v1640
        %v2027 = vpop.f32.mrb[0].mxu0
        %v2028 = vadd.f32 %v1931, %v2027
        %v2029 = vpop.f32.mrb[0].mxu0
        %v2030 = vpop.f32.mrb[0].mxu0
        %v2031 = vadd.f32 %v1934, %v2030
        %v2032 = vpop.f32.mrb[0].mxu0
        %2033 = vmatprep.mubr.bf16.mxu0 0
        %2034 = vmatmul.mubr.bf16.gmra.mrb[0].mxu0 %v1643
        %v2035 = vpop.f32.mrb[0].mxu0
        %v2036 = vadd.f32 %v1939, %v2035
        %v2037 = vpop.f32.mrb[0].mxu0
        %v2038 = vpop.f32.mrb[0].mxu0
        %v2039 = vadd.f32 %v1942, %v2038
        %v2040 = vpop.f32.mrb[0].mxu0
        %2041 = vmatprep.mubr.bf16.mxu0 0
        %2042 = vmatmul.mubr.bf16.gmra.mrb[0].mxu0 %v1646
        %v2043 = vpop.f32.mrb[0].mxu0
        %v2044 = vadd.f32 %v1947, %v2043
        %v2045 = vpop.f32.mrb[0].mxu0
        %v2046 = vpop.f32.mrb[0].mxu0
        %v2047 = vadd.f32 %v1950, %v2046
        %v2048 = vpop.f32.mrb[0].mxu0
        %2049 = vdwg.mxu0
        %v2050 = vadd.f32 %v1647, %v1988
        %v2051 = vadd.f32 %v1648, %v1991
        %v2052 = vadd.f32 %v1649, %v1996
        %v2053 = vadd.f32 %v1650, %v1999
        %v2054 = vadd.f32 %v1651, %v2004
        %v2055 = vadd.f32 %v1652, %v2007
        %v2056 = vadd.f32 %v1653, %v2012
        %v2057 = vadd.f32 %v1654, %v2015
        %v2058 = vadd.f32 %v1655, %v2020
        %v2059 = vadd.f32 %v1656, %v2023
        %v2060 = vadd.f32 %v1657, %v2028
        %v2061 = vadd.f32 %v1658, %v2031
        %v2062 = vadd.f32 %v1659, %v2036
        %v2063 = vadd.f32 %v1660, %v2039
        %v2064 = vadd.f32 %v1661, %v2044
        %v2065 = vadd.f32 %v1662, %v2047
        %2066 = vst [vmem:[#allocation3] sm:$0xff] %v2050
        %2067 = vst [vmem:[#allocation3 + $0x8] sm:$0xff] %v2051
        %2068 = vst [vmem:[#allocation3 + $0x10] sm:$0xff] %v2052
        %2069 = vst [vmem:[#allocation3 + $0x18] sm:$0xff] %v2053
        %2070 = vst [vmem:[#allocation3 + $0x20] sm:$0xff] %v2054
        %2071 = vst [vmem:[#allocation3 + $0x28] sm:$0xff] %v2055
        %2072 = vst [vmem:[#allocation3 + $0x30] sm:$0xff] %v2056
        %2073 = vst [vmem:[#allocation3 + $0x38] sm:$0xff] %v2057
        %2074 = vst [vmem:[#allocation3 + $0x40] sm:$0xff] %v2058
        %2075 = vst [vmem:[#allocation3 + $0x48] sm:$0xff] %v2059
        %2076 = vst [vmem:[#allocation3 + $0x50] sm:$0xff] %v2060
        %2077 = vst [vmem:[#allocation3 + $0x58] sm:$0xff] %v2061
        %2078 = vst [vmem:[#allocation3 + $0x60] sm:$0xff] %v2062
        %2079 = vst [vmem:[#allocation3 + $0x68] sm:$0xff] %v2063
        %2080 = vst [vmem:[#allocation3 + $0x70] sm:$0xff] %v2064
        %2081 = vst [vmem:[#allocation3 + $0x78] sm:$0xff] %v2065
        %v2082 = vld [vmem:[#allocation3] sm:$0xff]
        %v2083 = vld [vmem:[#allocation3 + $0x10] sm:$0xff]
        %v2084 = vld [vmem:[#allocation3 + $0x20] sm:$0xff]
        %v2085 = vld [vmem:[#allocation3 + $0x30] sm:$0xff]
        %v2086 = vld [vmem:[#allocation3 + $0x40] sm:$0xff]
        %v2087 = vld [vmem:[#allocation3 + $0x50] sm:$0xff]
        %v2088 = vld [vmem:[#allocation3 + $0x60] sm:$0xff]
        %v2089 = vld [vmem:[#allocation3 + $0x70] sm:$0xff]
        %2090 = vst [vmem:[%s378] sm:$0xff] %v2082
        %2091 = vst [vmem:[%s378 + $0x8] sm:$0xff] %v2083
        %2092 = vst [vmem:[%s378 + $0x10] sm:$0xff] %v2084
        %2093 = vst [vmem:[%s378 + $0x18] sm:$0xff] %v2085
        %2094 = vst [vmem:[%s378 + $0x20] sm:$0xff] %v2086
        %2095 = vst [vmem:[%s378 + $0x28] sm:$0xff] %v2087
        %2096 = vst [vmem:[%s378 + $0x30] sm:$0xff] %v2088
        %2097 = vst [vmem:[%s378 + $0x38] sm:$0xff] %v2089
        %s2098 = sand.u32 %s186, 1
        %s2099 = scalar_lea.sflag [#allocation6], %s2098
        %s2100 = sand.u32 %s186, 1
        %s2101 = smul.addr %s2100, 64
        %s2102 = scalar_lea.vmem [#allocation12], %s2101
        // Predicated region
        $region73: #{tpu_custom_call.1} parent=39 // pred_check
          %p2103 = pneg %p196
        $region74: #{tpu_custom_call.1} parent=39 // pred_check_branch
          %2105 = sbr.rel (%p2103) target = $region76
        $region75: #{tpu_custom_call.1} parent=39 // pred_region
          %s2107 = ssub.s32 1024, 1024
          %2108 = vsyncadd %s2099, %s2107
          %s2109 = smul.addr %s31, 8
          %s2110 = smul.addr %s30, 32
          %s2111 = sadd.s32 %s2109, %s2110
          %s2112 = smul.addr %s2111, 128
          %s2113 = scalar_lea.hbm %s5, %s2112
          %s2114 = sshll.u32 %s2102, 4
          %s2115 = int_to_ptr.vmem [resolvable:$true] %s2114
          %2120 = dma.vmem_to_hbm [thread:$0]  %s2115, 1024, %s2113, %s2099, 128, 128, 8
        $region76: #{tpu_custom_call.1} parent=39 // pred_fallthru
          _
      $region40: #{tpu_custom_call.1} parent=5 // pred_fallthru
        _
      %p2121 = scmp.le.s32.totalorder 2, %s21
      // Predicated region
      $region77: #{tpu_custom_call.1} parent=5 // pred_check
        %p2122 = pneg %p2121
      $region78: #{tpu_custom_call.1} parent=5 // pred_check_branch
        %2124 = sbr.rel (%p2122) target = $region80
      $region79: #{tpu_custom_call.1} parent=5 // pred_region
        %s2125 = ssub.s32 %s21, 2
        // Predicated region
        $region81: #{tpu_custom_call.1} parent=79 // pred_check
          %p2126 = pneg %p202
        $region82: #{tpu_custom_call.1} parent=79 // pred_check_branch
          %2128 = sbr.rel (%p2126) target = $region84
        $region83: #{tpu_custom_call.1} parent=79 // pred_region
          %s2129 = sand.u32 %s187, 1
          %s2130 = scalar_lea.sflag [#allocation6], %s2129
          %s2131 = sand.u32 %s187, 1
          %s2132 = smul.addr %s2131, 64
          %s2133 = scalar_lea.vmem [#allocation12], %s2132
          %2134 = dma.done %s2130, 1024
        $region84: #{tpu_custom_call.1} parent=79 // pred_fallthru
          _
      $region80: #{tpu_custom_call.1} parent=5 // pred_fallthru
        _
    $region6: #{tpu_custom_call.1} parent=1 // loop_footer
      %s25 = sadd.s32 1, %s21
    $region7: #{tpu_custom_call.1} parent=1 // loop_footer_branch
      %20 = sbr.rel target = $region3
    $region8: #{tpu_custom_call.1} parent=1 // loop_exit
      _
    %2135 = vsyncpa [#allocation5], 1
    %s2136 = scalar_lea.sflag [#allocation5], 1
    %2137 = vsyncpa %s2136, 1
    %2138 = vsyncpa [#allocation8], 1
    %s2139 = scalar_lea.sflag [#allocation8], 1
    %2140 = vsyncpa %s2139, 1
    %2141 = vsyncpa [#allocation11], 1
    %2142 = vsyncpa [#allocation6], 1
    %s2143 = scalar_lea.sflag [#allocation6], 1
    %2144 = vsyncpa %s2143, 1

</llo_original>
